<compile_context>
chip_gen: v7x
topology: tpu7x:2x2x1
jax: 0.10.0
libtpu: 0.0.40
codegen_flags: <defaults>
</compile_context>

<pallas_src>
import functools

import jax
import jax.numpy as jnp
from jax.experimental import pallas as pl
from jax.experimental.pallas import tpu as pltpu

LANE = 128                        # pad all dims to multiples of this (lane-dense)
_VMEM_LIMIT = 48 * 1024 * 1024    # <= v7x 64 MiB physical; kernels below use ~8 MiB


def _round_up(x, m):
    return ((x + m - 1) // m) * m


def _pad2(x, row_mult, col_mult):
    r, c = x.shape
    rp, cp = _round_up(r, row_mult), _round_up(c, col_mult)
    if (rp, cp) == (r, c):
        return x
    return jnp.pad(x, ((0, rp - r), (0, cp - c)))   # zero padding (required, see note)


def _pick_tile(dim, pref, min_blocks=1):
    """Largest 128*2^k tile <= pref that divides dim, keeping >= min_blocks blocks."""
    assert dim % LANE == 0, f"dim {dim} must be padded to a multiple of {LANE}"
    t = LANE
    while (t * 2 <= pref and dim % (t * 2) == 0
           and dim // (t * 2) >= min_blocks):
        t *= 2
    return t


# ---------------------------------------------------------------------------
# Pallas kernels
# ---------------------------------------------------------------------------
def _matmul_kernel(x_ref, w_ref, o_ref, acc_ref):
    """o = x @ w; f32 accumulation over the k grid axis, cast in the epilogue."""
    k = pl.program_id(2)

    @pl.when(k == 0)
    def _():
        acc_ref[...] = jnp.zeros_like(acc_ref)

    acc_ref[...] += jnp.dot(x_ref[...], w_ref[...],
                            preferred_element_type=jnp.float32)

    @pl.when(k == pl.num_programs(2) - 1)
    def _():
        o_ref[...] = acc_ref[...].astype(o_ref.dtype)


def _matmul_single_k_kernel(x_ref, w_ref, o_ref):
    """o = x @ w when K fits one block: no scratch round-trip, no reduction axis."""
    o_ref[...] = jnp.dot(x_ref[...], w_ref[...],
                         preferred_element_type=jnp.float32).astype(o_ref.dtype)


def _aggregate_jk_kernel(logits_in_ref, a_ref, xw_ref, b_ref, wh_ref,
                         h_ref, logits_ref, acc_ref):
    """acc = sum_k A[i,k] @ XW[k]; epilogue: h = relu(acc + b) (bf16 out) and
    logits[i] = logits_in[i] + h @ w_head  (fused JK 'cat' + Linear slice)."""
    k = pl.program_id(1)

    @pl.when(k == 0)
    def _():
        acc_ref[...] = jnp.zeros_like(acc_ref)

    acc_ref[...] += jnp.dot(a_ref[...], xw_ref[...],
                            preferred_element_type=jnp.float32)

    @pl.when(k == pl.num_programs(1) - 1)
    def _():
        h = jnp.maximum(acc_ref[...] + b_ref[...], 0.0)     # f32 bias + ReLU
        h_bf16 = h.astype(h_ref.dtype)
        h_ref[...] = h_bf16
        # Concat-free JumpingKnowledge('cat') + Linear: logits += h_l @ lin_w[l*H:(l+1)*H]
        logits_ref[...] = logits_in_ref[...] + jnp.dot(
            h_bf16, wh_ref[...], preferred_element_type=jnp.float32)


# ---------------------------------------------------------------------------
# pallas_call wrappers
# ---------------------------------------------------------------------------
def _tiled_matmul(x, w, *, out_dtype):
    """Generic tiled matmul (used for the cheap X @ W feature transform)."""
    m, kdim = x.shape
    _, n = w.shape
    tm = _pick_tile(m, 512, min_blocks=2)
    tn = _pick_tile(n, 256)
    tk = _pick_tile(kdim, 512)
    nk = kdim // tk

    if nk == 1:
        # Whole K in one block -> skip the accumulator scratch entirely.
        return pl.pallas_call(
            _matmul_single_k_kernel,
            out_shape=jax.ShapeDtypeStruct((m, n), out_dtype),
            grid_spec=pltpu.PrefetchScalarGridSpec(
                num_scalar_prefetch=0,
                grid=(m // tm, n // tn),
                in_specs=[
                    pl.BlockSpec((tm, kdim), lambda i, j: (i, 0)),
                    pl.BlockSpec((kdim, tn), lambda i, j: (0, j)),
                ],
                out_specs=pl.BlockSpec((tm, tn), lambda i, j: (i, j)),
            ),
            compiler_params=pltpu.CompilerParams(
                dimension_semantics=("parallel", "parallel"),
                vmem_limit_bytes=_VMEM_LIMIT,
            ),
        )(x, w)

    return pl.pallas_call(
        _matmul_kernel,
        out_shape=jax.ShapeDtypeStruct((m, n), out_dtype),
        grid_spec=pltpu.PrefetchScalarGridSpec(
            num_scalar_prefetch=0,
            grid=(m // tm, n // tn, nk),
            in_specs=[
                pl.BlockSpec((tm, tk), lambda i, j, k: (i, k)),
                pl.BlockSpec((tk, tn), lambda i, j, k: (k, j)),
            ],
            out_specs=pl.BlockSpec((tm, tn), lambda i, j, k: (i, j)),
            scratch_shapes=[pltpu.VMEM((tm, tn), jnp.float32)],
        ),
        compiler_params=pltpu.CompilerParams(
            dimension_semantics=("parallel", "parallel", "arbitrary"),
            vmem_limit_bytes=_VMEM_LIMIT,
        ),
    )(x, w)


def _gcn_aggregate_jk(logits, a_bf16, xw, b, w_head):
    """h = relu(A_hat @ XW + b) (bf16) and logits += h @ w_head, in one pass over A_hat."""
    m, kdim = a_bf16.shape
    _, hdim = xw.shape
    _, cdim = logits.shape
    tm = _pick_tile(m, 1024, min_blocks=2)   # big M tile -> XW re-fetched only m/tm times
    tk = _pick_tile(kdim, 1024)

    flops = 2 * m * kdim * hdim + 2 * m * hdim * cdim
    bytes_accessed = (2 * m * kdim                      # A_hat bf16 (dominant)
                      + (m // tm) * 2 * kdim * hdim     # XW re-fetch per M tile
                      + 2 * m * hdim                    # h writeback (bf16)
                      + 8 * m * cdim                    # logits read + write (f32)
                      + 2 * hdim * cdim + 4 * hdim)     # head weights + bias

    return pl.pallas_call(
        _aggregate_jk_kernel,
        out_shape=(jax.ShapeDtypeStruct((m, hdim), jnp.bfloat16),
                   jax.ShapeDtypeStruct((m, cdim), jnp.float32)),
        grid_spec=pltpu.PrefetchScalarGridSpec(
            num_scalar_prefetch=0,
            grid=(m // tm, kdim // tk),
            in_specs=[
                pl.BlockSpec((tm, cdim), lambda i, k: (i, 0)),     # logits (aliased in)
                pl.BlockSpec((tm, tk), lambda i, k: (i, k)),       # A_hat tile
                pl.BlockSpec((tk, hdim), lambda i, k: (k, 0)),     # XW (full feature width)
                pl.BlockSpec((1, hdim), lambda i, k: (0, 0)),      # bias (resident)
                pl.BlockSpec((hdim, cdim), lambda i, k: (0, 0)),   # head weights (resident)
            ],
            out_specs=[
                pl.BlockSpec((tm, hdim), lambda i, k: (i, 0)),     # h (bf16)
                pl.BlockSpec((tm, cdim), lambda i, k: (i, 0)),     # logits (f32)
            ],
            scratch_shapes=[pltpu.VMEM((tm, hdim), jnp.float32)],
        ),
        compiler_params=pltpu.CompilerParams(
            dimension_semantics=("parallel", "arbitrary"),
            vmem_limit_bytes=_VMEM_LIMIT,
        ),
        cost_estimate=pl.CostEstimate(flops=flops, transcendentals=0,
                                      bytes_accessed=bytes_accessed),
        input_output_aliases={0: 1},   # accumulate logits in place (P8)
    )(logits, a_bf16, xw, b, w_head)


# ---------------------------------------------------------------------------
# One-time layout prep (hoisted out of the per-forward path)
# ---------------------------------------------------------------------------
def prepare_adjacency(a_hat):
    """Pad A_hat to lane multiples and cast to bf16 ONCE."""
    return _pad2(a_hat, LANE, LANE).astype(jnp.bfloat16)


def prepare_params(params):
    """Pad/cast/split all weights once so the forward does no layout work."""
    hidden = params["convs"][0][0].shape[1]
    prepped = {"convs": [], "heads": []}
    for l, (w, b) in enumerate(params["convs"]):
        prepped["convs"].append((
            _pad2(w, LANE, LANE).astype(jnp.bfloat16),
            _pad2(b, 1, LANE).astype(jnp.float32),
        ))
        w_head = params["lin_w"][l * hidden:(l + 1) * hidden]
        prepped["heads"].append(_pad2(w_head, LANE, LANE).astype(jnp.bfloat16))
    prepped["lin_b"] = _pad2(params["lin_b"], 1, LANE).astype(jnp.float32)
    return prepped


# ---------------------------------------------------------------------------
# JKNet forward (dropout p=0 -> identity). Whole forward is one jit.
# ---------------------------------------------------------------------------
@functools.partial(jax.jit, static_argnames=("n_labels",))
def jknet_forward(prepped, x, a_bf16, *, n_labels):
    n, din = x.shape
    n_pad = a_bf16.shape[0]
    c_pad = prepped["lin_b"].shape[1]

    # Node features padded to (n_pad, din_pad); padded rows/cols are zero.
    h = jnp.pad(x, ((0, n_pad - n), (0, _round_up(din, LANE) - din))).astype(jnp.bfloat16)

    # Head accumulator seeded with the (padded) head bias.
    logits = jnp.broadcast_to(prepped["lin_b"], (n_pad, c_pad))

    for (w_bf16, b_pad), w_head in zip(prepped["convs"], prepped["heads"]):
        # feature transform: XW (cheap pass, bf16 out feeds the MXU directly)
        xw = _tiled_matmul(h, w_bf16, out_dtype=jnp.bfloat16)
        # aggregation + bias + ReLU + fused JK head (logits += h_l @ lin_w slice)
        h, logits = _gcn_aggregate_jk(logits, a_bf16, xw, b_pad, w_head)

    return logits[:n, :n_labels]


# ---------------------------------------------------------------------------
# Glue: dense normalized adjacency (GCN normalization with self loops)
# ---------------------------------------------------------------------------
def build_gcn_adj(edge_index, num_nodes):
    row, col = edge_index[0], edge_index[1]
    loop = jnp.arange(num_nodes, dtype=edge_index.dtype)
    row = jnp.concatenate([row, loop])
    col = jnp.concatenate([col, loop])
    w = jnp.ones(row.shape[0], dtype=jnp.float32)
    deg = jnp.zeros((num_nodes,), jnp.float32).at[col].add(w)   # matches PyG GCNConv
    dinv = jnp.where(deg > 0, 1.0 / jnp.sqrt(deg), 0.0)
    norm = dinv[row] * w * dinv[col]
    a_hat = jnp.zeros((num_nodes, num_nodes), jnp.float32).at[col, row].add(norm)
    return a_hat


def init_params(key, din, hidden, n_layers, n_labels):
    params = {"convs": []}
    dims_in = [din] + [hidden] * (n_layers - 1)
    for d_in in dims_in:
        key, k1, k2 = jax.random.split(key, 3)
        scale = 1.0 / jnp.sqrt(jnp.float32(d_in))
        w = jax.random.normal(k1, (d_in, hidden), jnp.float32) * scale
        b = jax.random.normal(k2, (1, hidden), jnp.float32) * 0.1   # nonzero bias: stricter test
        params["convs"].append((w, b))
    key, k3, k4 = jax.random.split(key, 3)
    fan_in = hidden * n_layers
    params["lin_w"] = jax.random.normal(k3, (fan_in, n_labels), jnp.float32) / jnp.sqrt(
        jnp.float32(fan_in))
    params["lin_b"] = jax.random.normal(k4, (1, n_labels), jnp.float32) * 0.1
    return params


# pure-JAX reference mirroring the kernels' mixed precision
def jknet_reference(params, x, a_hat):
    a_bf16 = a_hat.astype(jnp.bfloat16)
    xs = []
    h = x.astype(jnp.bfloat16)
    for (w, b) in params["convs"]:
        xw = jnp.dot(h, w.astype(jnp.bfloat16),
                     preferred_element_type=jnp.float32).astype(jnp.bfloat16)
        h_f32 = jnp.maximum(jnp.dot(a_bf16, xw, preferred_element_type=jnp.float32) + b, 0.0)
        h = h_f32.astype(jnp.bfloat16)
        xs.append(h_f32)
    jk = jnp.concatenate(xs, axis=-1)                       # JumpingKnowledge('cat')
    return jnp.dot(jk.astype(jnp.bfloat16), params["lin_w"].astype(jnp.bfloat16),
                   preferred_element_type=jnp.float32) + params["lin_b"]


if __name__ == "__main__":
    key = jax.random.PRNGKey(0)

    # small problem: 16 nodes, din=8, hidden=32, 3 layers, 4 classes
    N, DIN, HIDDEN, N_LAYERS, N_LABELS = 16, 8, 32, 3, 4

    key, kx = jax.random.split(key)
    x = jax.random.normal(kx, (N, DIN), jnp.float32)

    # deterministic undirected edge set (ring + a couple of chords)
    src = jnp.arange(N, dtype=jnp.int32)
    dst = (src + 1) % N
    row = jnp.concatenate([src, dst, jnp.array([0, 5], jnp.int32)])
    col = jnp.concatenate([dst, src, jnp.array([5, 0], jnp.int32)])
    edge_index = jnp.stack([row, col], axis=0)

    a_hat = build_gcn_adj(edge_index, N)
    params = init_params(key, DIN, HIDDEN, N_LAYERS, N_LABELS)

    a_bf16 = prepare_adjacency(a_hat)     # hoisted: A_hat pad + bf16 cast, once
    prepped = prepare_params(params)      # hoisted: weight pad/cast/head-slice, once

    out = jknet_forward(prepped, x, a_bf16, n_labels=N_LABELS)
    out = jax.block_until_ready(out)

    ref = jknet_reference(params, x, a_hat)
    assert out.shape == (N, N_LABELS)
    assert jnp.allclose(out, ref, atol=1e-2, rtol=1e-2)

    print("KERNEL_OK")
</pallas_src>

<mosaic_0001>
module attributes {stable_mosaic.version = 11 : i64} {
  func.func @_matmul_single_k_kernel(%arg0: i32, %arg1: i32, %arg2: memref<128x128xbf16, #tpu.memory_space<vmem>>, %arg3: memref<128x128xbf16, #tpu.memory_space<vmem>>, %arg4: memref<128x128xbf16, #tpu.memory_space<vmem>>) attributes {dimension_semantics = [#tpu.dimension_semantics<parallel>, #tpu.dimension_semantics<parallel>], iteration_bounds = array<i64: 1, 1>, scalar_prefetch = 0 : i64, scratch_operands = 0 : i64, tpu.core_type = #tpu.core_type<tc>, window_params = [{transform_indices = @transform_0, window_bounds = array<i64: 128, 128>}, {transform_indices = @transform_1, window_bounds = array<i64: 128, 128>}, {transform_indices = @transform_2, window_bounds = array<i64: 128, 128>}]} {
    %c0 = arith.constant 0 : index
    %c0_0 = arith.constant 0 : index
    %0 = vector.load %arg2[%c0, %c0_0] : memref<128x128xbf16, #tpu.memory_space<vmem>>, vector<128x128xbf16>
    %c0_1 = arith.constant 0 : index
    %c0_2 = arith.constant 0 : index
    %1 = vector.load %arg3[%c0_1, %c0_2] : memref<128x128xbf16, #tpu.memory_space<vmem>>, vector<128x128xbf16>
    %cst = arith.constant dense<0.000000e+00> : vector<128x128xf32>
    %2 = tpu.matmul %0, %1, %cst {dimension_numbers = #tpu.dot_dimension_numbers<[1], [0], [0], [1], [0, 0, 1, 1], [], []>} : vector<128x128xbf16>, vector<128x128xbf16>, vector<128x128xf32> -> vector<128x128xf32>
    %3 = arith.truncf %2 : vector<128x128xf32> to vector<128x128xbf16>
    %c0_3 = arith.constant 0 : index
    %c0_4 = arith.constant 0 : index
    %4 = vector.load %arg4[%c0_3, %c0_4] : memref<128x128xbf16, #tpu.memory_space<vmem>>, vector<128x128xbf16>
    tpu.vector_store %arg4[%c0_3, %c0_4], %3 {strides = array<i32>} : memref<128x128xbf16, #tpu.memory_space<vmem>>, vector<128x128xbf16>,
    return
  }
  func.func @transform_0(%arg0: i32, %arg1: i32) -> (i32, i32) {
    %c0_i32 = arith.constant 0 : i32
    %c0_i32_0 = arith.constant 0 : i32
    return %arg0, %c0_i32 : i32, i32
  }
  func.func @transform_1(%arg0: i32, %arg1: i32) -> (i32, i32) {
    %c0_i32 = arith.constant 0 : i32
    %c0_i32_0 = arith.constant 0 : i32
    return %c0_i32, %arg1 : i32, i32
  }
  func.func @transform_2(%arg0: i32, %arg1: i32) -> (i32, i32) {
    %c0_i32 = arith.constant 0 : i32
    return %arg0, %arg1 : i32, i32
  }
}

module attributes {stable_mosaic.version = 11 : i64} {
  func.func @_aggregate_jk_kernel(%arg0: i32, %arg1: i32, %arg2: memref<128x128xf32, #tpu.memory_space<vmem>>, %arg3: memref<128x128xbf16, #tpu.memory_space<vmem>>, %arg4: memref<128x128xbf16, #tpu.memory_space<vmem>>, %arg5: memref<1x128xf32, #tpu.memory_space<vmem>>, %arg6: memref<128x128xbf16, #tpu.memory_space<vmem>>, %arg7: memref<128x128xbf16, #tpu.memory_space<vmem>>, %arg8: memref<128x128xf32, #tpu.memory_space<vmem>>, %arg9: memref<128x128xf32, #tpu.memory_space<vmem>>) attributes {dimension_semantics = [#tpu.dimension_semantics<parallel>, #tpu.dimension_semantics<arbitrary>], iteration_bounds = array<i64: 1, 1>, scalar_prefetch = 0 : i64, scratch_operands = 1 : i64, tpu.core_type = #tpu.core_type<tc>, window_params = [{transform_indices = @transform_0, window_bounds = array<i64: 128, 128>}, {transform_indices = @transform_1, window_bounds = array<i64: 128, 128>}, {transform_indices = @transform_2, window_bounds = array<i64: 128, 128>}, {pipeline_mode = #tpu.pipeline_mode<synchronous>, transform_indices = @transform_3, window_bounds = array<i64: 1, 128>}, {pipeline_mode = #tpu.pipeline_mode<synchronous>, transform_indices = @transform_4, window_bounds = array<i64: 128, 128>}, {transform_indices = @transform_5, window_bounds = array<i64: 128, 128>}, {transform_indices = @transform_6, window_bounds = array<i64: 128, 128>}]} {
    %c0_i32 = arith.constant 0 : i32
    %0 = arith.cmpi eq, %arg1, %c0_i32 : i32
    %1 = arith.extui %0 : i1 to i32
    %c0_i32_0 = arith.constant 0 : i32
    %2 = arith.cmpi ne, %1, %c0_i32_0 : i32
    scf.if %2 {
      %cst_10 = arith.constant 0.000000e+00 : f32
      %12 = vector.broadcast %cst_10 : f32 to vector<128x128xf32>
      %c0_11 = arith.constant 0 : index
      %c0_12 = arith.constant 0 : index
      %13 = vector.load %arg9[%c0_11, %c0_12] : memref<128x128xf32, #tpu.memory_space<vmem>>, vector<128x128xf32>
      tpu.vector_store %arg9[%c0_11, %c0_12], %12 {strides = array<i32>} : memref<128x128xf32, #tpu.memory_space<vmem>>, vector<128x128xf32>,
    } else {
    }
    %c0 = arith.constant 0 : index
    %c0_1 = arith.constant 0 : index
    %3 = vector.load %arg9[%c0, %c0_1] : memref<128x128xf32, #tpu.memory_space<vmem>>, vector<128x128xf32>
    %c0_2 = arith.constant 0 : index
    %c0_3 = arith.constant 0 : index
    %4 = vector.load %arg3[%c0_2, %c0_3] : memref<128x128xbf16, #tpu.memory_space<vmem>>, vector<128x128xbf16>
    %c0_4 = arith.constant 0 : index
    %c0_5 = arith.constant 0 : index
    %5 = vector.load %arg4[%c0_4, %c0_5] : memref<128x128xbf16, #tpu.memory_space<vmem>>, vector<128x128xbf16>
    %cst = arith.constant dense<0.000000e+00> : vector<128x128xf32>
    %6 = tpu.matmul %4, %5, %cst {dimension_numbers = #tpu.dot_dimension_numbers<[1], [0], [0], [1], [0, 0, 1, 1], [], []>} : vector<128x128xbf16>, vector<128x128xbf16>, vector<128x128xf32> -> vector<128x128xf32>
    %7 = arith.addf %3, %6 : vector<128x128xf32>
    %c0_6 = arith.constant 0 : index
    %c0_7 = arith.constant 0 : index
    %8 = vector.load %arg9[%c0_6, %c0_7] : memref<128x128xf32, #tpu.memory_space<vmem>>, vector<128x128xf32>
    tpu.vector_store %arg9[%c0_6, %c0_7], %7 {strides = array<i32>} : memref<128x128xf32, #tpu.memory_space<vmem>>, vector<128x128xf32>,
    %c0_i32_8 = arith.constant 0 : i32
    %9 = arith.cmpi eq, %arg1, %c0_i32_8 : i32
    %10 = arith.extui %9 : i1 to i32
    %c0_i32_9 = arith.constant 0 : i32
    %11 = arith.cmpi ne, %10, %c0_i32_9 : i32
    scf.if %11 {
      %c0_10 = arith.constant 0 : index
      %c0_11 = arith.constant 0 : index
      %12 = vector.load %arg9[%c0_10, %c0_11] : memref<128x128xf32, #tpu.memory_space<vmem>>, vector<128x128xf32>
      %c0_12 = arith.constant 0 : index
      %c0_13 = arith.constant 0 : index
      %13 = vector.load %arg5[%c0_12, %c0_13] : memref<1x128xf32, #tpu.memory_space<vmem>>, vector<1x128xf32>
      %14 = vector.broadcast %13 : vector<1x128xf32> to vector<128x128xf32>
      %15 = arith.addf %12, %14 : vector<128x128xf32>
      %cst_14 = arith.constant 0.000000e+00 : f32
      %16 = vector.broadcast %cst_14 : f32 to vector<128x128xf32>
      %17 = arith.maximumf %15, %16 : vector<128x128xf32>
      %18 = arith.truncf %17 : vector<128x128xf32> to vector<128x128xbf16>
      %c0_15 = arith.constant 0 : index
      %c0_16 = arith.constant 0 : index
      %19 = vector.load %arg7[%c0_15, %c0_16] : memref<128x128xbf16, #tpu.memory_space<vmem>>, vector<128x128xbf16>
      tpu.vector_store %arg7[%c0_15, %c0_16], %18 {strides = array<i32>} : memref<128x128xbf16, #tpu.memory_space<vmem>>, vector<128x128xbf16>,
      %c0_17 = arith.constant 0 : index
      %c0_18 = arith.constant 0 : index
      %20 = vector.load %arg2[%c0_17, %c0_18] : memref<128x128xf32, #tpu.memory_space<vmem>>, vector<128x128xf32>
      %c0_19 = arith.constant 0 : index
      %c0_20 = arith.constant 0 : index
      %21 = vector.load %arg6[%c0_19, %c0_20] : memref<128x128xbf16, #tpu.memory_space<vmem>>, vector<128x128xbf16>
      %cst_21 = arith.constant dense<0.000000e+00> : vector<128x128xf32>
      %22 = tpu.matmul %18, %21, %cst_21 {dimension_numbers = #tpu.dot_dimension_numbers<[1], [0], [0], [1], [0, 0, 1, 1], [], []>} : vector<128x128xbf16>, vector<128x128xbf16>, vector<128x128xf32> -> vector<128x128xf32>
      %23 = arith.addf %20, %22 : vector<128x128xf32>
      %c0_22 = arith.constant 0 : index
      %c0_23 = arith.constant 0 : index
      %24 = vector.load %arg8[%c0_22, %c0_23] : memref<128x128xf32, #tpu.memory_space<vmem>>, vector<128x128xf32>
      tpu.vector_store %arg8[%c0_22, %c0_23], %23 {strides = array<i32>} : memref<128x128xf32, #tpu.memory_space<vmem>>, vector<128x128xf32>,
    } else {
    }
    return
  }
  func.func @transform_0(%arg0: i32, %arg1: i32) -> (i32, i32) {
    %c0_i32 = arith.constant 0 : i32
    %c0_i32_0 = arith.constant 0 : i32
    return %arg0, %c0_i32 : i32, i32
  }
  func.func @transform_1(%arg0: i32, %arg1: i32) -> (i32, i32) {
    %c0_i32 = arith.constant 0 : i32
    return %arg0, %arg1 : i32, i32
  }
  func.func @transform_2(%arg0: i32, %arg1: i32) -> (i32, i32) {
    %c0_i32 = arith.constant 0 : i32
    %c0_i32_0 = arith.constant 0 : i32
    return %arg1, %c0_i32 : i32, i32
  }
  func.func @transform_3(%arg0: i32, %arg1: i32) -> (i32, i32) {
    %c0_i32 = arith.constant 0 : i32
    %c0_i32_0 = arith.constant 0 : i32
    %c0_i32_1 = arith.constant 0 : i32
    return %c0_i32, %c0_i32_0 : i32, i32
  }
  func.func @transform_4(%arg0: i32, %arg1: i32) -> (i32, i32) {
    %c0_i32 = arith.constant 0 : i32
    %c0_i32_0 = arith.constant 0 : i32
    %c0_i32_1 = arith.constant 0 : i32
    return %c0_i32, %c0_i32_0 : i32, i32
  }
  func.func @transform_5(%arg0: i32, %arg1: i32) -> (i32, i32) {
    %c0_i32 = arith.constant 0 : i32
    %c0_i32_0 = arith.constant 0 : i32
    return %arg0, %c0_i32 : i32, i32
  }
  func.func @transform_6(%arg0: i32, %arg1: i32) -> (i32, i32) {
    %c0_i32 = arith.constant 0 : i32
    %c0_i32_0 = arith.constant 0 : i32
    return %arg0, %c0_i32 : i32, i32
  }
}

module attributes {stable_mosaic.version = 11 : i64} {
  func.func @_aggregate_jk_kernel(%arg0: i32, %arg1: i32, %arg2: memref<128x128xf32, #tpu.memory_space<vmem>>, %arg3: memref<128x128xbf16, #tpu.memory_space<vmem>>, %arg4: memref<128x128xbf16, #tpu.memory_space<vmem>>, %arg5: memref<1x128xf32, #tpu.memory_space<vmem>>, %arg6: memref<128x128xbf16, #tpu.memory_space<vmem>>, %arg7: memref<128x128xbf16, #tpu.memory_space<vmem>>, %arg8: memref<128x128xf32, #tpu.memory_space<vmem>>, %arg9: memref<128x128xf32, #tpu.memory_space<vmem>>) attributes {dimension_semantics = [#tpu.dimension_semantics<parallel>, #tpu.dimension_semantics<arbitrary>], iteration_bounds = array<i64: 1, 1>, scalar_prefetch = 0 : i64, scratch_operands = 1 : i64, tpu.core_type = #tpu.core_type<tc>, window_params = [{transform_indices = @transform_0, window_bounds = array<i64: 128, 128>}, {transform_indices = @transform_1, window_bounds = array<i64: 128, 128>}, {transform_indices = @transform_2, window_bounds = array<i64: 128, 128>}, {pipeline_mode = #tpu.pipeline_mode<synchronous>, transform_indices = @transform_3, window_bounds = array<i64: 1, 128>}, {pipeline_mode = #tpu.pipeline_mode<synchronous>, transform_indices = @transform_4, window_bounds = array<i64: 128, 128>}, {transform_indices = @transform_5, window_bounds = array<i64: 128, 128>}, {transform_indices = @transform_6, window_bounds = array<i64: 128, 128>}]} {
    %c0_i32 = arith.constant 0 : i32
    %0 = arith.cmpi eq, %arg1, %c0_i32 : i32
    %1 = arith.extui %0 : i1 to i32
    %c0_i32_0 = arith.constant 0 : i32
    %2 = arith.cmpi ne, %1, %c0_i32_0 : i32
    scf.if %2 {
      %cst_10 = arith.constant 0.000000e+00 : f32
      %12 = vector.broadcast %cst_10 : f32 to vector<128x128xf32>
      %c0_11 = arith.constant 0 : index
      %c0_12 = arith.constant 0 : index
      %13 = vector.load %arg9[%c0_11, %c0_12] : memref<128x128xf32, #tpu.memory_space<vmem>>, vector<128x128xf32>
      tpu.vector_store %arg9[%c0_11, %c0_12], %12 {strides = array<i32>} : memref<128x128xf32, #tpu.memory_space<vmem>>, vector<128x128xf32>,
    } else {
    }
    %c0 = arith.constant 0 : index
    %c0_1 = arith.constant 0 : index
    %3 = vector.load %arg9[%c0, %c0_1] : memref<128x128xf32, #tpu.memory_space<vmem>>, vector<128x128xf32>
    %c0_2 = arith.constant 0 : index
    %c0_3 = arith.constant 0 : index
    %4 = vector.load %arg3[%c0_2, %c0_3] : memref<128x128xbf16, #tpu.memory_space<vmem>>, vector<128x128xbf16>
    %c0_4 = arith.constant 0 : index
    %c0_5 = arith.constant 0 : index
    %5 = vector.load %arg4[%c0_4, %c0_5] : memref<128x128xbf16, #tpu.memory_space<vmem>>, vector<128x128xbf16>
    %cst = arith.constant dense<0.000000e+00> : vector<128x128xf32>
    %6 = tpu.matmul %4, %5, %cst {dimension_numbers = #tpu.dot_dimension_numbers<[1], [0], [0], [1], [0, 0, 1, 1], [], []>} : vector<128x128xbf16>, vector<128x128xbf16>, vector<128x128xf32> -> vector<128x128xf32>
    %7 = arith.addf %3, %6 : vector<128x128xf32>
    %c0_6 = arith.constant 0 : index
    %c0_7 = arith.constant 0 : index
    %8 = vector.load %arg9[%c0_6, %c0_7] : memref<128x128xf32, #tpu.memory_space<vmem>>, vector<128x128xf32>
    tpu.vector_store %arg9[%c0_6, %c0_7], %7 {strides = array<i32>} : memref<128x128xf32, #tpu.memory_space<vmem>>, vector<128x128xf32>,
    %c0_i32_8 = arith.constant 0 : i32
    %9 = arith.cmpi eq, %arg1, %c0_i32_8 : i32
    %10 = arith.extui %9 : i1 to i32
    %c0_i32_9 = arith.constant 0 : i32
    %11 = arith.cmpi ne, %10, %c0_i32_9 : i32
    scf.if %11 {
      %c0_10 = arith.constant 0 : index
      %c0_11 = arith.constant 0 : index
      %12 = vector.load %arg9[%c0_10, %c0_11] : memref<128x128xf32, #tpu.memory_space<vmem>>, vector<128x128xf32>
      %c0_12 = arith.constant 0 : index
      %c0_13 = arith.constant 0 : index
      %13 = vector.load %arg5[%c0_12, %c0_13] : memref<1x128xf32, #tpu.memory_space<vmem>>, vector<1x128xf32>
      %14 = vector.broadcast %13 : vector<1x128xf32> to vector<128x128xf32>
      %15 = arith.addf %12, %14 : vector<128x128xf32>
      %cst_14 = arith.constant 0.000000e+00 : f32
      %16 = vector.broadcast %cst_14 : f32 to vector<128x128xf32>
      %17 = arith.maximumf %15, %16 : vector<128x128xf32>
      %18 = arith.truncf %17 : vector<128x128xf32> to vector<128x128xbf16>
      %c0_15 = arith.constant 0 : index
      %c0_16 = arith.constant 0 : index
      %19 = vector.load %arg7[%c0_15, %c0_16] : memref<128x128xbf16, #tpu.memory_space<vmem>>, vector<128x128xbf16>
      tpu.vector_store %arg7[%c0_15, %c0_16], %18 {strides = array<i32>} : memref<128x128xbf16, #tpu.memory_space<vmem>>, vector<128x128xbf16>,
      %c0_17 = arith.constant 0 : index
      %c0_18 = arith.constant 0 : index
      %20 = vector.load %arg2[%c0_17, %c0_18] : memref<128x128xf32, #tpu.memory_space<vmem>>, vector<128x128xf32>
      %c0_19 = arith.constant 0 : index
      %c0_20 = arith.constant 0 : index
      %21 = vector.load %arg6[%c0_19, %c0_20] : memref<128x128xbf16, #tpu.memory_space<vmem>>, vector<128x128xbf16>
      %cst_21 = arith.constant dense<0.000000e+00> : vector<128x128xf32>
      %22 = tpu.matmul %18, %21, %cst_21 {dimension_numbers = #tpu.dot_dimension_numbers<[1], [0], [0], [1], [0, 0, 1, 1], [], []>} : vector<128x128xbf16>, vector<128x128xbf16>, vector<128x128xf32> -> vector<128x128xf32>
      %23 = arith.addf %20, %22 : vector<128x128xf32>
      %c0_22 = arith.constant 0 : index
      %c0_23 = arith.constant 0 : index
      %24 = vector.load %arg8[%c0_22, %c0_23] : memref<128x128xf32, #tpu.memory_space<vmem>>, vector<128x128xf32>
      tpu.vector_store %arg8[%c0_22, %c0_23], %23 {strides = array<i32>} : memref<128x128xf32, #tpu.memory_space<vmem>>, vector<128x128xf32>,
    } else {
    }
    return
  }
  func.func @transform_0(%arg0: i32, %arg1: i32) -> (i32, i32) {
    %c0_i32 = arith.constant 0 : i32
    %c0_i32_0 = arith.constant 0 : i32
    return %arg0, %c0_i32 : i32, i32
  }
  func.func @transform_1(%arg0: i32, %arg1: i32) -> (i32, i32) {
    %c0_i32 = arith.constant 0 : i32
    return %arg0, %arg1 : i32, i32
  }
  func.func @transform_2(%arg0: i32, %arg1: i32) -> (i32, i32) {
    %c0_i32 = arith.constant 0 : i32
    %c0_i32_0 = arith.constant 0 : i32
    return %arg1, %c0_i32 : i32, i32
  }
  func.func @transform_3(%arg0: i32, %arg1: i32) -> (i32, i32) {
    %c0_i32 = arith.constant 0 : i32
    %c0_i32_0 = arith.constant 0 : i32
    %c0_i32_1 = arith.constant 0 : i32
    return %c0_i32, %c0_i32_0 : i32, i32
  }
  func.func @transform_4(%arg0: i32, %arg1: i32) -> (i32, i32) {
    %c0_i32 = arith.constant 0 : i32
    %c0_i32_0 = arith.constant 0 : i32
    %c0_i32_1 = arith.constant 0 : i32
    return %c0_i32, %c0_i32_0 : i32, i32
  }
  func.func @transform_5(%arg0: i32, %arg1: i32) -> (i32, i32) {
    %c0_i32 = arith.constant 0 : i32
    %c0_i32_0 = arith.constant 0 : i32
    return %arg0, %c0_i32 : i32, i32
  }
  func.func @transform_6(%arg0: i32, %arg1: i32) -> (i32, i32) {
    %c0_i32 = arith.constant 0 : i32
    %c0_i32_0 = arith.constant 0 : i32
    return %arg0, %c0_i32 : i32, i32
  }
}

</mosaic_0001>

<llo_original>
// kernel: jknet_forward.6
$region0: #{jknet_forward.6}
  #allocation0 [shape = 'u32[]', space=smem, size = 0x4, offset = 0x4, fixed_abs, tag = 'smem constant byte address 0x4 - core index']
  #allocation1 [shape = 'u32[144,128]{1,0:T(1,128)}', space=vmem, size = 0x12000, scoped, tag = 'internal scratch']
  %s0 = inlined_call_operand.vmem [shape: bf16[128,128], index: 0, kind: input, shape index: {}]
  %s1 = inlined_call_operand.vmem [shape: bf16[128,128], index: 1, kind: input, shape index: {}]
  %s2 = inlined_call_operand.vmem [shape: bf16[128,128], index: 2, kind: output, shape index: {}]
  %s3 = sld [smem:[#allocation0]]
  $region18: #{jknet_forward.6} parent=0
    _
  %s5 = ssub.s32 1, %s3
  %s6 = scalar_select 0, %s5, %s3
  // Predicated region
  $region2: #{jknet_forward.6} parent=0 // pred_check
    _
  $region3: #{jknet_forward.6} parent=0 // pred_check_branch
    %8 = sbr.rel (0) target = $region5
  $region4: #{jknet_forward.6} parent=0 // pred_region
    _
  $region5: #{jknet_forward.6} parent=0 // pred_fallthru
    _
  // Predicated region
  $region6: #{jknet_forward.6} parent=0 // pred_check
    _
  $region7: #{jknet_forward.6} parent=0 // pred_check_branch
    %10 = sbr.rel (0) target = $region9
  $region8: #{jknet_forward.6} parent=0 // pred_region
    _
  $region9: #{jknet_forward.6} parent=0 // pred_fallthru
    _
  %v12 = vld [vmem:[%s0] sm:$0xf]
  %v13 = vld [vmem:[%s0 + $0x4] sm:$0xf]
  %v14 = vld [vmem:[%s0 + $0x8] sm:$0xf]
  %v15 = vld [vmem:[%s0 + $0xc] sm:$0xf]
  %v16 = vld [vmem:[%s0 + $0x10] sm:$0xf]
  %v17 = vld [vmem:[%s0 + $0x14] sm:$0xf]
  %v18 = vld [vmem:[%s0 + $0x18] sm:$0xf]
  %v19 = vld [vmem:[%s0 + $0x1c] sm:$0xf]
  %v20 = vld [vmem:[%s0 + $0x20] sm:$0xf]
  %v21 = vld [vmem:[%s0 + $0x24] sm:$0xf]
  %v22 = vld [vmem:[%s0 + $0x28] sm:$0xf]
  %v23 = vld [vmem:[%s0 + $0x2c] sm:$0xf]
  %v24 = vld [vmem:[%s0 + $0x30] sm:$0xf]
  %v25 = vld [vmem:[%s0 + $0x34] sm:$0xf]
  %v26 = vld [vmem:[%s0 + $0x38] sm:$0xf]
  %v27 = vld [vmem:[%s0 + $0x3c] sm:$0xf]
  %v28 = vld [vmem:[%s1] sm:$0xf]
  %v29 = vld [vmem:[%s1 + $0x4] sm:$0xf]
  %v30 = vld [vmem:[%s1 + $0x8] sm:$0xf]
  %v31 = vld [vmem:[%s1 + $0xc] sm:$0xf]
  %v32 = vld [vmem:[%s1 + $0x10] sm:$0xf]
  %v33 = vld [vmem:[%s1 + $0x14] sm:$0xf]
  %v34 = vld [vmem:[%s1 + $0x18] sm:$0xf]
  %v35 = vld [vmem:[%s1 + $0x1c] sm:$0xf]
  %v36 = vld [vmem:[%s1 + $0x20] sm:$0xf]
  %v37 = vld [vmem:[%s1 + $0x24] sm:$0xf]
  %v38 = vld [vmem:[%s1 + $0x28] sm:$0xf]
  %v39 = vld [vmem:[%s1 + $0x2c] sm:$0xf]
  %v40 = vld [vmem:[%s1 + $0x30] sm:$0xf]
  %v41 = vld [vmem:[%s1 + $0x34] sm:$0xf]
  %v42 = vld [vmem:[%s1 + $0x38] sm:$0xf]
  %v43 = vld [vmem:[%s1 + $0x3c] sm:$0xf]
  %v60 = vunpack.c.l.b16 %v12
  %v61 = vunpack.c.l.b16 %v13
  %v62 = vunpack.c.l.b16 %v14
  %v63 = vunpack.c.l.b16 %v15
  %v64 = vunpack.c.l.b16 %v16
  %v65 = vunpack.c.l.b16 %v17
  %v66 = vunpack.c.l.b16 %v18
  %v67 = vunpack.c.l.b16 %v19
  %v68 = vunpack.c.l.b16 %v20
  %v69 = vunpack.c.l.b16 %v21
  %v70 = vunpack.c.l.b16 %v22
  %v71 = vunpack.c.l.b16 %v23
  %v72 = vunpack.c.l.b16 %v24
  %v73 = vunpack.c.l.b16 %v25
  %v74 = vunpack.c.l.b16 %v26
  %v75 = vunpack.c.l.b16 %v27
  %v76 = vpack.c.b16 %v61, %v60
  %v77 = vpack.c.b16 %v63, %v62
  %v78 = vpack.c.b16 %v65, %v64
  %v79 = vpack.c.b16 %v67, %v66
  %v80 = vpack.c.b16 %v69, %v68
  %v81 = vpack.c.b16 %v71, %v70
  %v82 = vpack.c.b16 %v73, %v72
  %v83 = vpack.c.b16 %v75, %v74
  %v108 = vunpack.c.l.b16 %v28
  %v109 = vunpack.c.l.b16 %v29
  %v110 = vunpack.c.l.b16 %v30
  %v111 = vunpack.c.l.b16 %v31
  %v112 = vunpack.c.l.b16 %v32
  %v113 = vunpack.c.l.b16 %v33
  %v114 = vunpack.c.l.b16 %v34
  %v115 = vunpack.c.l.b16 %v35
  %v116 = vunpack.c.l.b16 %v36
  %v117 = vunpack.c.l.b16 %v37
  %v118 = vunpack.c.l.b16 %v38
  %v119 = vunpack.c.l.b16 %v39
  %v120 = vunpack.c.l.b16 %v40
  %v121 = vunpack.c.l.b16 %v41
  %v122 = vunpack.c.l.b16 %v42
  %v123 = vunpack.c.l.b16 %v43
  %v124 = vpack.c.b16 %v109, %v108
  %v125 = vpack.c.b16 %v111, %v110
  %v126 = vpack.c.b16 %v113, %v112
  %v127 = vpack.c.b16 %v115, %v114
  %v128 = vpack.c.b16 %v117, %v116
  %v129 = vpack.c.b16 %v119, %v118
  %v130 = vpack.c.b16 %v121, %v120
  %v131 = vpack.c.b16 %v123, %v122
  %140 = vmatprep.subr.bf16.mxu0 0
  %141 = vmatpush1.bf16.msra.mxu0 %v124
  %142 = vmatprep.subr.bf16.mxu0 0
  %143 = vmatpush1.bf16.msra.mxu0 %v125
  %144 = vmatprep.subr.bf16.mxu0 0
  %145 = vmatpush1.bf16.msra.mxu0 %v126
  %146 = vmatprep.subr.bf16.mxu0 0
  %147 = vmatpush1.bf16.msra.mxu0 %v127
  %148 = vmatprep.subr.bf16.mxu0 0
  %149 = vmatpush1.bf16.msra.mxu0 %v128
  %150 = vmatprep.subr.bf16.mxu0 0
  %151 = vmatpush1.bf16.msra.mxu0 %v129
  %152 = vmatprep.subr.bf16.mxu0 0
  %153 = vmatpush1.bf16.msra.mxu0 %v130
  %154 = vmatprep.subr.bf16.mxu0 0
  %155 = vmatpush1.bf16.msra.mxu0 %v131
  %156 = vmatprep.subr.bf16.mxu0 0
  %157 = vmatpush1.bf16.msra.mxu0 0
  %158 = vmatprep.subr.bf16.mxu0 0
  %159 = vmatpush1.bf16.msra.mxu0 0
  %160 = vmatprep.subr.bf16.mxu0 0
  %161 = vmatpush1.bf16.msra.mxu0 0
  %162 = vmatprep.subr.bf16.mxu0 0
  %163 = vmatpush1.bf16.msra.mxu0 0
  %164 = vmatprep.subr.bf16.mxu0 0
  %165 = vmatpush1.bf16.msra.mxu0 0
  %166 = vmatprep.subr.bf16.mxu0 0
  %167 = vmatpush1.bf16.msra.mxu0 0
  %168 = vmatprep.subr.bf16.mxu0 0
  %169 = vmatpush1.bf16.msra.mxu0 0
  %170 = vmatprep.subr.bf16.mxu0 0
  %171 = vmatpush1.bf16.msra.mxu0 0
  %172 = vmatprep.mubr.bf16.mxu0 0
  %173 = vmatmul.mubr.bf16.gmra.mrb[0].mxu0 %v76
  %v174 = vpop.f32.mrb[0].mxu0
  %v175 = vadd.f32 0.0, %v174
  %v176 = vpop.f32.mrb[0].mxu0
  %v177 = vpop.f32.mrb[0].mxu0
  %v178 = vadd.f32 0.0, %v177
  %v179 = vpop.f32.mrb[0].mxu0
  %180 = vmatprep.mubr.bf16.mxu0 0
  %181 = vmatmul.mubr.bf16.gmra.mrb[0].mxu0 %v77
  %v182 = vpop.f32.mrb[0].mxu0
  %v183 = vadd.f32 0.0, %v182
  %v184 = vpop.f32.mrb[0].mxu0
  %v185 = vpop.f32.mrb[0].mxu0
  %v186 = vadd.f32 0.0, %v185
  %v187 = vpop.f32.mrb[0].mxu0
  %188 = vmatprep.mubr.bf16.mxu0 0
  %189 = vmatmul.mubr.bf16.gmra.mrb[0].mxu0 %v78
  %v190 = vpop.f32.mrb[0].mxu0
  %v191 = vadd.f32 0.0, %v190
  %v192 = vpop.f32.mrb[0].mxu0
  %v193 = vpop.f32.mrb[0].mxu0
  %v194 = vadd.f32 0.0, %v193
  %v195 = vpop.f32.mrb[0].mxu0
  %196 = vmatprep.mubr.bf16.mxu0 0
  %197 = vmatmul.mubr.bf16.gmra.mrb[0].mxu0 %v79
  %v198 = vpop.f32.mrb[0].mxu0
  %v199 = vadd.f32 0.0, %v198
  %v200 = vpop.f32.mrb[0].mxu0
  %v201 = vpop.f32.mrb[0].mxu0
  %v202 = vadd.f32 0.0, %v201
  %v203 = vpop.f32.mrb[0].mxu0
  %204 = vmatprep.mubr.bf16.mxu0 0
  %205 = vmatmul.mubr.bf16.gmra.mrb[0].mxu0 %v80
  %v206 = vpop.f32.mrb[0].mxu0
  %v207 = vadd.f32 0.0, %v206
  %v208 = vpop.f32.mrb[0].mxu0
  %v209 = vpop.f32.mrb[0].mxu0
  %v210 = vadd.f32 0.0, %v209
  %v211 = vpop.f32.mrb[0].mxu0
  %212 = vmatprep.mubr.bf16.mxu0 0
  %213 = vmatmul.mubr.bf16.gmra.mrb[0].mxu0 %v81
  %v214 = vpop.f32.mrb[0].mxu0
  %v215 = vadd.f32 0.0, %v214
  %v216 = vpop.f32.mrb[0].mxu0
  %v217 = vpop.f32.mrb[0].mxu0
  %v218 = vadd.f32 0.0, %v217
  %v219 = vpop.f32.mrb[0].mxu0
  %220 = vmatprep.mubr.bf16.mxu0 0
  %221 = vmatmul.mubr.bf16.gmra.mrb[0].mxu0 %v82
  %v222 = vpop.f32.mrb[0].mxu0
  %v223 = vadd.f32 0.0, %v222
  %v224 = vpop.f32.mrb[0].mxu0
  %v225 = vpop.f32.mrb[0].mxu0
  %v226 = vadd.f32 0.0, %v225
  %v227 = vpop.f32.mrb[0].mxu0
  %228 = vmatprep.mubr.bf16.mxu0 0
  %229 = vmatmul.mubr.bf16.gmra.mrb[0].mxu0 %v83
  %v230 = vpop.f32.mrb[0].mxu0
  %v231 = vadd.f32 0.0, %v230
  %v232 = vpop.f32.mrb[0].mxu0
  %v233 = vpop.f32.mrb[0].mxu0
  %v234 = vadd.f32 0.0, %v233
  %v235 = vpop.f32.mrb[0].mxu0
  %236 = vdwg.mxu0
  %v237 = vpack.c.bf16 %v178, %v175
  %v238 = vpack.c.bf16 %v186, %v183
  %v239 = vpack.c.bf16 %v194, %v191
  %v240 = vpack.c.bf16 %v202, %v199
  %v241 = vpack.c.bf16 %v210, %v207
  %v242 = vpack.c.bf16 %v218, %v215
  %v243 = vpack.c.bf16 %v226, %v223
  %v244 = vpack.c.bf16 %v234, %v231
  %v253 = vunpack.c.l.b16 %v237
  %v254 = vunpack.c.h.b16 %v237
  %v255 = vunpack.c.l.b16 %v238
  %v256 = vunpack.c.h.b16 %v238
  %v257 = vunpack.c.l.b16 %v239
  %v258 = vunpack.c.h.b16 %v239
  %v259 = vunpack.c.l.b16 %v240
  %v260 = vunpack.c.h.b16 %v240
  %v261 = vunpack.c.l.b16 %v241
  %v262 = vunpack.c.h.b16 %v241
  %v263 = vunpack.c.l.b16 %v242
  %v264 = vunpack.c.h.b16 %v242
  %v265 = vunpack.c.l.b16 %v243
  %v266 = vunpack.c.h.b16 %v243
  %v267 = vunpack.c.l.b16 %v244
  %v268 = vunpack.c.h.b16 %v244
  %v269 = vpack.c.b16 %v253, %v253
  %v270 = vpack.c.b16 %v254, %v254
  %v271 = vpack.c.b16 %v255, %v255
  %v272 = vpack.c.b16 %v256, %v256
  %v273 = vpack.c.b16 %v257, %v257
  %v274 = vpack.c.b16 %v258, %v258
  %v275 = vpack.c.b16 %v259, %v259
  %v276 = vpack.c.b16 %v260, %v260
  %v277 = vpack.c.b16 %v261, %v261
  %v278 = vpack.c.b16 %v262, %v262
  %v279 = vpack.c.b16 %v263, %v263
  %v280 = vpack.c.b16 %v264, %v264
  %v281 = vpack.c.b16 %v265, %v265
  %v282 = vpack.c.b16 %v266, %v266
  %v283 = vpack.c.b16 %v267, %v267
  %v284 = vpack.c.b16 %v268, %v268
  %301 = vst [vmem:[%s2] sm:$0xf] %v269
  %302 = vst [vmem:[%s2 + $0x4] sm:$0xf] %v270
  %303 = vst [vmem:[%s2 + $0x8] sm:$0xf] %v271
  %304 = vst [vmem:[%s2 + $0xc] sm:$0xf] %v272
  %305 = vst [vmem:[%s2 + $0x10] sm:$0xf] %v273
  %306 = vst [vmem:[%s2 + $0x14] sm:$0xf] %v274
  %307 = vst [vmem:[%s2 + $0x18] sm:$0xf] %v275
  %308 = vst [vmem:[%s2 + $0x1c] sm:$0xf] %v276
  %309 = vst [vmem:[%s2 + $0x20] sm:$0xf] %v277
  %310 = vst [vmem:[%s2 + $0x24] sm:$0xf] %v278
  %311 = vst [vmem:[%s2 + $0x28] sm:$0xf] %v279
  %312 = vst [vmem:[%s2 + $0x2c] sm:$0xf] %v280
  %313 = vst [vmem:[%s2 + $0x30] sm:$0xf] %v281
  %314 = vst [vmem:[%s2 + $0x34] sm:$0xf] %v282
  %315 = vst [vmem:[%s2 + $0x38] sm:$0xf] %v283
  %316 = vst [vmem:[%s2 + $0x3c] sm:$0xf] %v284
  // Predicated region
  $region10: #{jknet_forward.6} parent=0 // pred_check
    _
  $region11: #{jknet_forward.6} parent=0 // pred_check_branch
    %318 = sbr.rel (0) target = $region13
  $region12: #{jknet_forward.6} parent=0 // pred_region
    _
  $region13: #{jknet_forward.6} parent=0 // pred_fallthru
    _
  // Predicated region
  $region14: #{jknet_forward.6} parent=0 // pred_check
    _
  $region15: #{jknet_forward.6} parent=0 // pred_check_branch
    %320 = sbr.rel (0) target = $region17
  $region16: #{jknet_forward.6} parent=0 // pred_region
    _
  $region17: #{jknet_forward.6} parent=0 // pred_fallthru
    _

// kernel: jknet_forward.7
$region0: #{jknet_forward.7}
  #allocation0 [shape = 'u32[]', space=smem, size = 0x4, offset = 0x4, fixed_abs, tag = 'smem constant byte address 0x4 - core index']
  #allocation1 [shape = 'u32[144,128]{1,0:T(1,128)}', space=vmem, size = 0x12000, scoped, tag = 'internal scratch']
  #allocation2 [shape = 'f32[128,128]{1,0:T(8,128)}', space=vmem, size = 0x10000, scoped, tag = 'scratch operand']
  %s0 = inlined_call_operand.vmem [shape: f32[128,128], index: 0, kind: input, shape index: {}, may-alias: {0,6}]
  %s1 = inlined_call_operand.vmem [shape: bf16[128,128], index: 1, kind: input, shape index: {}]
  %s2 = inlined_call_operand.vmem [shape: bf16[128,128], index: 2, kind: input, shape index: {}]
  %s3 = inlined_call_operand.vmem [shape: f32[1,128], index: 3, kind: input, shape index: {}]
  %s4 = inlined_call_operand.vmem [shape: bf16[128,128], index: 4, kind: input, shape index: {}]
  %s5 = inlined_call_operand.vmem [shape: bf16[128,128], index: 5, kind: output, shape index: {0}]
  %s6 = inlined_call_operand.vmem [shape: f32[128,128], index: 6, kind: output, shape index: {1}, may-alias: {0,6}]
  %7 = xla_tuple %s5, %s6
  %s8 = sld [smem:[#allocation0]]
  $region46: #{jknet_forward.7} parent=0
    _
  %s10 = ssub.s32 1, %s8
  %s11 = scalar_select 0, %s10, %s8
  // Predicated region
  $region2: #{jknet_forward.7} parent=0 // pred_check
    _
  $region3: #{jknet_forward.7} parent=0 // pred_check_branch
    %13 = sbr.rel (0) target = $region5
  $region4: #{jknet_forward.7} parent=0 // pred_region
    _
  $region5: #{jknet_forward.7} parent=0 // pred_fallthru
    _
  // Predicated region
  $region6: #{jknet_forward.7} parent=0 // pred_check
    _
  $region7: #{jknet_forward.7} parent=0 // pred_check_branch
    %15 = sbr.rel (0) target = $region9
  $region8: #{jknet_forward.7} parent=0 // pred_region
    _
  $region9: #{jknet_forward.7} parent=0 // pred_fallthru
    _
  // Predicated region
  $region10: #{jknet_forward.7} parent=0 // pred_check
    _
  $region11: #{jknet_forward.7} parent=0 // pred_check_branch
    %17 = sbr.rel (0) target = $region13
  $region12: #{jknet_forward.7} parent=0 // pred_region
    _
  $region13: #{jknet_forward.7} parent=0 // pred_fallthru
    _
  // Predicated region
  $region14: #{jknet_forward.7} parent=0 // pred_check
    _
  $region15: #{jknet_forward.7} parent=0 // pred_check_branch
    %19 = sbr.rel (0) target = $region17
  $region16: #{jknet_forward.7} parent=0 // pred_region
    _
  $region17: #{jknet_forward.7} parent=0 // pred_fallthru
    _
  // Predicated region
  $region18: #{jknet_forward.7} parent=0 // pred_check
    _
  $region19: #{jknet_forward.7} parent=0 // pred_check_branch
    %21 = sbr.rel (0) target = $region21
  $region20: #{jknet_forward.7} parent=0 // pred_region
    _
  $region21: #{jknet_forward.7} parent=0 // pred_fallthru
    _
  %p23 = scmp.eq.s32.totalorder 0, 0
  // Predicated region
  $region22: #{jknet_forward.7} parent=0 // pred_check
    %p24 = pneg %p23
  $region23: #{jknet_forward.7} parent=0 // pred_check_branch
    %26 = sbr.rel (%p24) target = $region25
  $region24: #{jknet_forward.7} parent=0 // pred_region
    %27 = vst [vmem:[#allocation2] sm:$0xff] 0.0
    %28 = vst [vmem:[#allocation2 + $0x8] sm:$0xff] 0.0
    %29 = vst [vmem:[#allocation2 + $0x10] sm:$0xff] 0.0
    %30 = vst [vmem:[#allocation2 + $0x18] sm:$0xff] 0.0
    %31 = vst [vmem:[#allocation2 + $0x20] sm:$0xff] 0.0
    %32 = vst [vmem:[#allocation2 + $0x28] sm:$0xff] 0.0
    %33 = vst [vmem:[#allocation2 + $0x30] sm:$0xff] 0.0
    %34 = vst [vmem:[#allocation2 + $0x38] sm:$0xff] 0.0
    %35 = vst [vmem:[#allocation2 + $0x40] sm:$0xff] 0.0
    %36 = vst [vmem:[#allocation2 + $0x48] sm:$0xff] 0.0
    %37 = vst [vmem:[#allocation2 + $0x50] sm:$0xff] 0.0
    %38 = vst [vmem:[#allocation2 + $0x58] sm:$0xff] 0.0
    %39 = vst [vmem:[#allocation2 + $0x60] sm:$0xff] 0.0
    %40 = vst [vmem:[#allocation2 + $0x68] sm:$0xff] 0.0
    %41 = vst [vmem:[#allocation2 + $0x70] sm:$0xff] 0.0
    %42 = vst [vmem:[#allocation2 + $0x78] sm:$0xff] 0.0
  $region25: #{jknet_forward.7} parent=0 // pred_fallthru
    _
  %v43 = vld [vmem:[#allocation2] sm:$0xff]
  %v44 = vld [vmem:[#allocation2 + $0x8] sm:$0xff]
  %v45 = vld [vmem:[#allocation2 + $0x10] sm:$0xff]
  %v46 = vld [vmem:[#allocation2 + $0x18] sm:$0xff]
  %v47 = vld [vmem:[#allocation2 + $0x20] sm:$0xff]
  %v48 = vld [vmem:[#allocation2 + $0x28] sm:$0xff]
  %v49 = vld [vmem:[#allocation2 + $0x30] sm:$0xff]
  %v50 = vld [vmem:[#allocation2 + $0x38] sm:$0xff]
  %v51 = vld [vmem:[#allocation2 + $0x40] sm:$0xff]
  %v52 = vld [vmem:[#allocation2 + $0x48] sm:$0xff]
  %v53 = vld [vmem:[#allocation2 + $0x50] sm:$0xff]
  %v54 = vld [vmem:[#allocation2 + $0x58] sm:$0xff]
  %v55 = vld [vmem:[#allocation2 + $0x60] sm:$0xff]
  %v56 = vld [vmem:[#allocation2 + $0x68] sm:$0xff]
  %v57 = vld [vmem:[#allocation2 + $0x70] sm:$0xff]
  %v58 = vld [vmem:[#allocation2 + $0x78] sm:$0xff]
  %v59 = vld [vmem:[%s1] sm:$0xf]
  %v60 = vld [vmem:[%s1 + $0x4] sm:$0xf]
  %v61 = vld [vmem:[%s1 + $0x8] sm:$0xf]
  %v62 = vld [vmem:[%s1 + $0xc] sm:$0xf]
  %v63 = vld [vmem:[%s1 + $0x10] sm:$0xf]
  %v64 = vld [vmem:[%s1 + $0x14] sm:$0xf]
  %v65 = vld [vmem:[%s1 + $0x18] sm:$0xf]
  %v66 = vld [vmem:[%s1 + $0x1c] sm:$0xf]
  %v67 = vld [vmem:[%s1 + $0x20] sm:$0xf]
  %v68 = vld [vmem:[%s1 + $0x24] sm:$0xf]
  %v69 = vld [vmem:[%s1 + $0x28] sm:$0xf]
  %v70 = vld [vmem:[%s1 + $0x2c] sm:$0xf]
  %v71 = vld [vmem:[%s1 + $0x30] sm:$0xf]
  %v72 = vld [vmem:[%s1 + $0x34] sm:$0xf]
  %v73 = vld [vmem:[%s1 + $0x38] sm:$0xf]
  %v74 = vld [vmem:[%s1 + $0x3c] sm:$0xf]
  %v75 = vld [vmem:[%s2] sm:$0xf]
  %v76 = vld [vmem:[%s2 + $0x4] sm:$0xf]
  %v77 = vld [vmem:[%s2 + $0x8] sm:$0xf]
  %v78 = vld [vmem:[%s2 + $0xc] sm:$0xf]
  %v79 = vld [vmem:[%s2 + $0x10] sm:$0xf]
  %v80 = vld [vmem:[%s2 + $0x14] sm:$0xf]
  %v81 = vld [vmem:[%s2 + $0x18] sm:$0xf]
  %v82 = vld [vmem:[%s2 + $0x1c] sm:$0xf]
  %v83 = vld [vmem:[%s2 + $0x20] sm:$0xf]
  %v84 = vld [vmem:[%s2 + $0x24] sm:$0xf]
  %v85 = vld [vmem:[%s2 + $0x28] sm:$0xf]
  %v86 = vld [vmem:[%s2 + $0x2c] sm:$0xf]
  %v87 = vld [vmem:[%s2 + $0x30] sm:$0xf]
  %v88 = vld [vmem:[%s2 + $0x34] sm:$0xf]
  %v89 = vld [vmem:[%s2 + $0x38] sm:$0xf]
  %v90 = vld [vmem:[%s2 + $0x3c] sm:$0xf]
  %v107 = vunpack.c.l.b16 %v59
  %v108 = vunpack.c.l.b16 %v60
  %v109 = vunpack.c.l.b16 %v61
  %v110 = vunpack.c.l.b16 %v62
  %v111 = vunpack.c.l.b16 %v63
  %v112 = vunpack.c.l.b16 %v64
  %v113 = vunpack.c.l.b16 %v65
  %v114 = vunpack.c.l.b16 %v66
  %v115 = vunpack.c.l.b16 %v67
  %v116 = vunpack.c.l.b16 %v68
  %v117 = vunpack.c.l.b16 %v69
  %v118 = vunpack.c.l.b16 %v70
  %v119 = vunpack.c.l.b16 %v71
  %v120 = vunpack.c.l.b16 %v72
  %v121 = vunpack.c.l.b16 %v73
  %v122 = vunpack.c.l.b16 %v74
  %v123 = vpack.c.b16 %v108, %v107
  %v124 = vpack.c.b16 %v110, %v109
  %v125 = vpack.c.b16 %v112, %v111
  %v126 = vpack.c.b16 %v114, %v113
  %v127 = vpack.c.b16 %v116, %v115
  %v128 = vpack.c.b16 %v118, %v117
  %v129 = vpack.c.b16 %v120, %v119
  %v130 = vpack.c.b16 %v122, %v121
  %v155 = vunpack.c.l.b16 %v75
  %v156 = vunpack.c.l.b16 %v76
  %v157 = vunpack.c.l.b16 %v77
  %v158 = vunpack.c.l.b16 %v78
  %v159 = vunpack.c.l.b16 %v79
  %v160 = vunpack.c.l.b16 %v80
  %v161 = vunpack.c.l.b16 %v81
  %v162 = vunpack.c.l.b16 %v82
  %v163 = vunpack.c.l.b16 %v83
  %v164 = vunpack.c.l.b16 %v84
  %v165 = vunpack.c.l.b16 %v85
  %v166 = vunpack.c.l.b16 %v86
  %v167 = vunpack.c.l.b16 %v87
  %v168 = vunpack.c.l.b16 %v88
  %v169 = vunpack.c.l.b16 %v89
  %v170 = vunpack.c.l.b16 %v90
  %v171 = vpack.c.b16 %v156, %v155
  %v172 = vpack.c.b16 %v158, %v157
  %v173 = vpack.c.b16 %v160, %v159
  %v174 = vpack.c.b16 %v162, %v161
  %v175 = vpack.c.b16 %v164, %v163
  %v176 = vpack.c.b16 %v166, %v165
  %v177 = vpack.c.b16 %v168, %v167
  %v178 = vpack.c.b16 %v170, %v169
  %187 = vmatprep.subr.bf16.mxu0 0
  %188 = vmatpush1.bf16.msra.mxu0 %v171
  %189 = vmatprep.subr.bf16.mxu0 0
  %190 = vmatpush1.bf16.msra.mxu0 %v172
  %191 = vmatprep.subr.bf16.mxu0 0
  %192 = vmatpush1.bf16.msra.mxu0 %v173
  %193 = vmatprep.subr.bf16.mxu0 0
  %194 = vmatpush1.bf16.msra.mxu0 %v174
  %195 = vmatprep.subr.bf16.mxu0 0
  %196 = vmatpush1.bf16.msra.mxu0 %v175
  %197 = vmatprep.subr.bf16.mxu0 0
  %198 = vmatpush1.bf16.msra.mxu0 %v176
  %199 = vmatprep.subr.bf16.mxu0 0
  %200 = vmatpush1.bf16.msra.mxu0 %v177
  %201 = vmatprep.subr.bf16.mxu0 0
  %202 = vmatpush1.bf16.msra.mxu0 %v178
  %203 = vmatprep.subr.bf16.mxu0 0
  %204 = vmatpush1.bf16.msra.mxu0 0
  %205 = vmatprep.subr.bf16.mxu0 0
  %206 = vmatpush1.bf16.msra.mxu0 0
  %207 = vmatprep.subr.bf16.mxu0 0
  %208 = vmatpush1.bf16.msra.mxu0 0
  %209 = vmatprep.subr.bf16.mxu0 0
  %210 = vmatpush1.bf16.msra.mxu0 0
  %211 = vmatprep.subr.bf16.mxu0 0
  %212 = vmatpush1.bf16.msra.mxu0 0
  %213 = vmatprep.subr.bf16.mxu0 0
  %214 = vmatpush1.bf16.msra.mxu0 0
  %215 = vmatprep.subr.bf16.mxu0 0
  %216 = vmatpush1.bf16.msra.mxu0 0
  %217 = vmatprep.subr.bf16.mxu0 0
  %218 = vmatpush1.bf16.msra.mxu0 0
  %219 = vmatprep.mubr.bf16.mxu0 0
  %220 = vmatmul.mubr.bf16.gmra.mrb[0].mxu0 %v123
  %v221 = vpop.f32.mrb[0].mxu0
  %v222 = vadd.f32 0.0, %v221
  %v223 = vpop.f32.mrb[0].mxu0
  %v224 = vpop.f32.mrb[0].mxu0
  %v225 = vadd.f32 0.0, %v224
  %v226 = vpop.f32.mrb[0].mxu0
  %227 = vmatprep.mubr.bf16.mxu0 0
  %228 = vmatmul.mubr.bf16.gmra.mrb[0].mxu0 %v124
  %v229 = vpop.f32.mrb[0].mxu0
  %v230 = vadd.f32 0.0, %v229
  %v231 = vpop.f32.mrb[0].mxu0
  %v232 = vpop.f32.mrb[0].mxu0
  %v233 = vadd.f32 0.0, %v232
  %v234 = vpop.f32.mrb[0].mxu0
  %235 = vmatprep.mubr.bf16.mxu0 0
  %236 = vmatmul.mubr.bf16.gmra.mrb[0].mxu0 %v125
  %v237 = vpop.f32.mrb[0].mxu0
  %v238 = vadd.f32 0.0, %v237
  %v239 = vpop.f32.mrb[0].mxu0
  %v240 = vpop.f32.mrb[0].mxu0
  %v241 = vadd.f32 0.0, %v240
  %v242 = vpop.f32.mrb[0].mxu0
  %243 = vmatprep.mubr.bf16.mxu0 0
  %244 = vmatmul.mubr.bf16.gmra.mrb[0].mxu0 %v126
  %v245 = vpop.f32.mrb[0].mxu0
  %v246 = vadd.f32 0.0, %v245
  %v247 = vpop.f32.mrb[0].mxu0
  %v248 = vpop.f32.mrb[0].mxu0
  %v249 = vadd.f32 0.0, %v248
  %v250 = vpop.f32.mrb[0].mxu0
  %251 = vmatprep.mubr.bf16.mxu0 0
  %252 = vmatmul.mubr.bf16.gmra.mrb[0].mxu0 %v127
  %v253 = vpop.f32.mrb[0].mxu0
  %v254 = vadd.f32 0.0, %v253
  %v255 = vpop.f32.mrb[0].mxu0
  %v256 = vpop.f32.mrb[0].mxu0
  %v257 = vadd.f32 0.0, %v256
  %v258 = vpop.f32.mrb[0].mxu0
  %259 = vmatprep.mubr.bf16.mxu0 0
  %260 = vmatmul.mubr.bf16.gmra.mrb[0].mxu0 %v128
  %v261 = vpop.f32.mrb[0].mxu0
  %v262 = vadd.f32 0.0, %v261
  %v263 = vpop.f32.mrb[0].mxu0
  %v264 = vpop.f32.mrb[0].mxu0
  %v265 = vadd.f32 0.0, %v264
  %v266 = vpop.f32.mrb[0].mxu0
  %267 = vmatprep.mubr.bf16.mxu0 0
  %268 = vmatmul.mubr.bf16.gmra.mrb[0].mxu0 %v129
  %v269 = vpop.f32.mrb[0].mxu0
  %v270 = vadd.f32 0.0, %v269
  %v271 = vpop.f32.mrb[0].mxu0
  %v272 = vpop.f32.mrb[0].mxu0
  %v273 = vadd.f32 0.0, %v272
  %v274 = vpop.f32.mrb[0].mxu0
  %275 = vmatprep.mubr.bf16.mxu0 0
  %276 = vmatmul.mubr.bf16.gmra.mrb[0].mxu0 %v130
  %v277 = vpop.f32.mrb[0].mxu0
  %v278 = vadd.f32 0.0, %v277
  %v279 = vpop.f32.mrb[0].mxu0
  %v280 = vpop.f32.mrb[0].mxu0
  %v281 = vadd.f32 0.0, %v280
  %v282 = vpop.f32.mrb[0].mxu0
  %283 = vdwg.mxu0
  %v284 = vadd.f32 %v43, %v222
  %v285 = vadd.f32 %v44, %v225
  %v286 = vadd.f32 %v45, %v230
  %v287 = vadd.f32 %v46, %v233
  %v288 = vadd.f32 %v47, %v238
  %v289 = vadd.f32 %v48, %v241
  %v290 = vadd.f32 %v49, %v246
  %v291 = vadd.f32 %v50, %v249
  %v292 = vadd.f32 %v51, %v254
  %v293 = vadd.f32 %v52, %v257
  %v294 = vadd.f32 %v53, %v262
  %v295 = vadd.f32 %v54, %v265
  %v296 = vadd.f32 %v55, %v270
  %v297 = vadd.f32 %v56, %v273
  %v298 = vadd.f32 %v57, %v278
  %v299 = vadd.f32 %v58, %v281
  %300 = vst [vmem:[#allocation2] sm:$0xff] %v284
  %301 = vst [vmem:[#allocation2 + $0x8] sm:$0xff] %v285
  %302 = vst [vmem:[#allocation2 + $0x10] sm:$0xff] %v286
  %303 = vst [vmem:[#allocation2 + $0x18] sm:$0xff] %v287
  %304 = vst [vmem:[#allocation2 + $0x20] sm:$0xff] %v288
  %305 = vst [vmem:[#allocation2 + $0x28] sm:$0xff] %v289
  %306 = vst [vmem:[#allocation2 + $0x30] sm:$0xff] %v290
  %307 = vst [vmem:[#allocation2 + $0x38] sm:$0xff] %v291
  %308 = vst [vmem:[#allocation2 + $0x40] sm:$0xff] %v292
  %309 = vst [vmem:[#allocation2 + $0x48] sm:$0xff] %v293
  %310 = vst [vmem:[#allocation2 + $0x50] sm:$0xff] %v294
  %311 = vst [vmem:[#allocation2 + $0x58] sm:$0xff] %v295
  %312 = vst [vmem:[#allocation2 + $0x60] sm:$0xff] %v296
  %313 = vst [vmem:[#allocation2 + $0x68] sm:$0xff] %v297
  %314 = vst [vmem:[#allocation2 + $0x70] sm:$0xff] %v298
  %315 = vst [vmem:[#allocation2 + $0x78] sm:$0xff] %v299
  // Predicated region
  $region26: #{jknet_forward.7} parent=0 // pred_check
    %p316 = pneg %p23
  $region27: #{jknet_forward.7} parent=0 // pred_check_branch
    %318 = sbr.rel (%p316) target = $region29
  $region28: #{jknet_forward.7} parent=0 // pred_region
    %v319 = vld [vmem:[#allocation2] sm:$0xff]
    %v320 = vld [vmem:[#allocation2 + $0x8] sm:$0xff]
    %v321 = vld [vmem:[#allocation2 + $0x10] sm:$0xff]
    %v322 = vld [vmem:[#allocation2 + $0x18] sm:$0xff]
    %v323 = vld [vmem:[#allocation2 + $0x20] sm:$0xff]
    %v324 = vld [vmem:[#allocation2 + $0x28] sm:$0xff]
    %v325 = vld [vmem:[#allocation2 + $0x30] sm:$0xff]
    %v326 = vld [vmem:[#allocation2 + $0x38] sm:$0xff]
    %v327 = vld [vmem:[#allocation2 + $0x40] sm:$0xff]
    %v328 = vld [vmem:[#allocation2 + $0x48] sm:$0xff]
    %v329 = vld [vmem:[#allocation2 + $0x50] sm:$0xff]
    %v330 = vld [vmem:[#allocation2 + $0x58] sm:$0xff]
    %v331 = vld [vmem:[#allocation2 + $0x60] sm:$0xff]
    %v332 = vld [vmem:[#allocation2 + $0x68] sm:$0xff]
    %v333 = vld [vmem:[#allocation2 + $0x70] sm:$0xff]
    %v334 = vld [vmem:[#allocation2 + $0x78] sm:$0xff]
    %v335 = vld [vmem:[%s3] sm:$0x1]
    %v337 = vlaneseq
    %v338 = vshrl.u32 %v337, 7
    %v339 = vsub.s32 0, %v338
    %v340 = vrot.slane %v335, %v339
    %v342 = vadd.f32 %v319, %v340
    %v343 = vadd.f32 %v320, %v340
    %v344 = vadd.f32 %v321, %v340
    %v345 = vadd.f32 %v322, %v340
    %v346 = vadd.f32 %v323, %v340
    %v347 = vadd.f32 %v324, %v340
    %v348 = vadd.f32 %v325, %v340
    %v349 = vadd.f32 %v326, %v340
    %v350 = vadd.f32 %v327, %v340
    %v351 = vadd.f32 %v328, %v340
    %v352 = vadd.f32 %v329, %v340
    %v353 = vadd.f32 %v330, %v340
    %v354 = vadd.f32 %v331, %v340
    %v355 = vadd.f32 %v332, %v340
    %v356 = vadd.f32 %v333, %v340
    %v357 = vadd.f32 %v334, %v340
    %v358 = vmax.f32 %v342, 0.0
    %v359 = vmax.f32 %v343, 0.0
    %v360 = vmax.f32 %v344, 0.0
    %v361 = vmax.f32 %v345, 0.0
    %v362 = vmax.f32 %v346, 0.0
    %v363 = vmax.f32 %v347, 0.0
    %v364 = vmax.f32 %v348, 0.0
    %v365 = vmax.f32 %v349, 0.0
    %v366 = vmax.f32 %v350, 0.0
    %v367 = vmax.f32 %v351, 0.0
    %v368 = vmax.f32 %v352, 0.0
    %v369 = vmax.f32 %v353, 0.0
    %v370 = vmax.f32 %v354, 0.0
    %v371 = vmax.f32 %v355, 0.0
    %v372 = vmax.f32 %v356, 0.0
    %v373 = vmax.f32 %v357, 0.0
    %v374 = vpack.c.bf16 %v359, %v358
    %v375 = vpack.c.bf16 %v361, %v360
    %v376 = vpack.c.bf16 %v363, %v362
    %v377 = vpack.c.bf16 %v365, %v364
    %v378 = vpack.c.bf16 %v367, %v366
    %v379 = vpack.c.bf16 %v369, %v368
    %v380 = vpack.c.bf16 %v371, %v370
    %v381 = vpack.c.bf16 %v373, %v372
    %v390 = vunpack.c.l.b16 %v374
    %v391 = vunpack.c.h.b16 %v374
    %v392 = vunpack.c.l.b16 %v375
    %v393 = vunpack.c.h.b16 %v375
    %v394 = vunpack.c.l.b16 %v376
    %v395 = vunpack.c.h.b16 %v376
    %v396 = vunpack.c.l.b16 %v377
    %v397 = vunpack.c.h.b16 %v377
    %v398 = vunpack.c.l.b16 %v378
    %v399 = vunpack.c.h.b16 %v378
    %v400 = vunpack.c.l.b16 %v379
    %v401 = vunpack.c.h.b16 %v379
    %v402 = vunpack.c.l.b16 %v380
    %v403 = vunpack.c.h.b16 %v380
    %v404 = vunpack.c.l.b16 %v381
    %v405 = vunpack.c.h.b16 %v381
    %v406 = vpack.c.b16 %v390, %v390
    %v407 = vpack.c.b16 %v391, %v391
    %v408 = vpack.c.b16 %v392, %v392
    %v409 = vpack.c.b16 %v393, %v393
    %v410 = vpack.c.b16 %v394, %v394
    %v411 = vpack.c.b16 %v395, %v395
    %v412 = vpack.c.b16 %v396, %v396
    %v413 = vpack.c.b16 %v397, %v397
    %v414 = vpack.c.b16 %v398, %v398
    %v415 = vpack.c.b16 %v399, %v399
    %v416 = vpack.c.b16 %v400, %v400
    %v417 = vpack.c.b16 %v401, %v401
    %v418 = vpack.c.b16 %v402, %v402
    %v419 = vpack.c.b16 %v403, %v403
    %v420 = vpack.c.b16 %v404, %v404
    %v421 = vpack.c.b16 %v405, %v405
    %438 = vst [vmem:[%s5] sm:$0xf] %v406
    %439 = vst [vmem:[%s5 + $0x4] sm:$0xf] %v407
    %440 = vst [vmem:[%s5 + $0x8] sm:$0xf] %v408
    %441 = vst [vmem:[%s5 + $0xc] sm:$0xf] %v409
    %442 = vst [vmem:[%s5 + $0x10] sm:$0xf] %v410
    %443 = vst [vmem:[%s5 + $0x14] sm:$0xf] %v411
    %444 = vst [vmem:[%s5 + $0x18] sm:$0xf] %v412
    %445 = vst [vmem:[%s5 + $0x1c] sm:$0xf] %v413
    %446 = vst [vmem:[%s5 + $0x20] sm:$0xf] %v414
    %447 = vst [vmem:[%s5 + $0x24] sm:$0xf] %v415
    %448 = vst [vmem:[%s5 + $0x28] sm:$0xf] %v416
    %449 = vst [vmem:[%s5 + $0x2c] sm:$0xf] %v417
    %450 = vst [vmem:[%s5 + $0x30] sm:$0xf] %v418
    %451 = vst [vmem:[%s5 + $0x34] sm:$0xf] %v419
    %452 = vst [vmem:[%s5 + $0x38] sm:$0xf] %v420
    %453 = vst [vmem:[%s5 + $0x3c] sm:$0xf] %v421
    %v454 = vld [vmem:[%s0] sm:$0xff]
    %v455 = vld [vmem:[%s0 + $0x8] sm:$0xff]
    %v456 = vld [vmem:[%s0 + $0x10] sm:$0xff]
    %v457 = vld [vmem:[%s0 + $0x18] sm:$0xff]
    %v458 = vld [vmem:[%s0 + $0x20] sm:$0xff]
    %v459 = vld [vmem:[%s0 + $0x28] sm:$0xff]
    %v460 = vld [vmem:[%s0 + $0x30] sm:$0xff]
    %v461 = vld [vmem:[%s0 + $0x38] sm:$0xff]
    %v462 = vld [vmem:[%s0 + $0x40] sm:$0xff]
    %v463 = vld [vmem:[%s0 + $0x48] sm:$0xff]
    %v464 = vld [vmem:[%s0 + $0x50] sm:$0xff]
    %v465 = vld [vmem:[%s0 + $0x58] sm:$0xff]
    %v466 = vld [vmem:[%s0 + $0x60] sm:$0xff]
    %v467 = vld [vmem:[%s0 + $0x68] sm:$0xff]
    %v468 = vld [vmem:[%s0 + $0x70] sm:$0xff]
    %v469 = vld [vmem:[%s0 + $0x78] sm:$0xff]
    %v470 = vld [vmem:[%s4] sm:$0xf]
    %v471 = vld [vmem:[%s4 + $0x4] sm:$0xf]
    %v472 = vld [vmem:[%s4 + $0x8] sm:$0xf]
    %v473 = vld [vmem:[%s4 + $0xc] sm:$0xf]
    %v474 = vld [vmem:[%s4 + $0x10] sm:$0xf]
    %v475 = vld [vmem:[%s4 + $0x14] sm:$0xf]
    %v476 = vld [vmem:[%s4 + $0x18] sm:$0xf]
    %v477 = vld [vmem:[%s4 + $0x1c] sm:$0xf]
    %v478 = vld [vmem:[%s4 + $0x20] sm:$0xf]
    %v479 = vld [vmem:[%s4 + $0x24] sm:$0xf]
    %v480 = vld [vmem:[%s4 + $0x28] sm:$0xf]
    %v481 = vld [vmem:[%s4 + $0x2c] sm:$0xf]
    %v482 = vld [vmem:[%s4 + $0x30] sm:$0xf]
    %v483 = vld [vmem:[%s4 + $0x34] sm:$0xf]
    %v484 = vld [vmem:[%s4 + $0x38] sm:$0xf]
    %v485 = vld [vmem:[%s4 + $0x3c] sm:$0xf]
    %v502 = vunpack.c.l.b16 %v470
    %v503 = vunpack.c.l.b16 %v471
    %v504 = vunpack.c.l.b16 %v472
    %v505 = vunpack.c.l.b16 %v473
    %v506 = vunpack.c.l.b16 %v474
    %v507 = vunpack.c.l.b16 %v475
    %v508 = vunpack.c.l.b16 %v476
    %v509 = vunpack.c.l.b16 %v477
    %v510 = vunpack.c.l.b16 %v478
    %v511 = vunpack.c.l.b16 %v479
    %v512 = vunpack.c.l.b16 %v480
    %v513 = vunpack.c.l.b16 %v481
    %v514 = vunpack.c.l.b16 %v482
    %v515 = vunpack.c.l.b16 %v483
    %v516 = vunpack.c.l.b16 %v484
    %v517 = vunpack.c.l.b16 %v485
    %v518 = vpack.c.b16 %v503, %v502
    %v519 = vpack.c.b16 %v505, %v504
    %v520 = vpack.c.b16 %v507, %v506
    %v521 = vpack.c.b16 %v509, %v508
    %v522 = vpack.c.b16 %v511, %v510
    %v523 = vpack.c.b16 %v513, %v512
    %v524 = vpack.c.b16 %v515, %v514
    %v525 = vpack.c.b16 %v517, %v516
    %534 = vmatprep.subr.bf16.mxu0 0
    %535 = vmatpush1.bf16.msra.mxu0 %v518
    %536 = vmatprep.subr.bf16.mxu0 0
    %537 = vmatpush1.bf16.msra.mxu0 %v519
    %538 = vmatprep.subr.bf16.mxu0 0
    %539 = vmatpush1.bf16.msra.mxu0 %v520
    %540 = vmatprep.subr.bf16.mxu0 0
    %541 = vmatpush1.bf16.msra.mxu0 %v521
    %542 = vmatprep.subr.bf16.mxu0 0
    %543 = vmatpush1.bf16.msra.mxu0 %v522
    %544 = vmatprep.subr.bf16.mxu0 0
    %545 = vmatpush1.bf16.msra.mxu0 %v523
    %546 = vmatprep.subr.bf16.mxu0 0
    %547 = vmatpush1.bf16.msra.mxu0 %v524
    %548 = vmatprep.subr.bf16.mxu0 0
    %549 = vmatpush1.bf16.msra.mxu0 %v525
    %550 = vmatprep.subr.bf16.mxu0 0
    %551 = vmatpush1.bf16.msra.mxu0 0
    %552 = vmatprep.subr.bf16.mxu0 0
    %553 = vmatpush1.bf16.msra.mxu0 0
    %554 = vmatprep.subr.bf16.mxu0 0
    %555 = vmatpush1.bf16.msra.mxu0 0
    %556 = vmatprep.subr.bf16.mxu0 0
    %557 = vmatpush1.bf16.msra.mxu0 0
    %558 = vmatprep.subr.bf16.mxu0 0
    %559 = vmatpush1.bf16.msra.mxu0 0
    %560 = vmatprep.subr.bf16.mxu0 0
    %561 = vmatpush1.bf16.msra.mxu0 0
    %562 = vmatprep.subr.bf16.mxu0 0
    %563 = vmatpush1.bf16.msra.mxu0 0
    %564 = vmatprep.subr.bf16.mxu0 0
    %565 = vmatpush1.bf16.msra.mxu0 0
    %566 = vmatprep.mubr.bf16.mxu0 0
    %567 = vmatmul.mubr.bf16.gmra.mrb[0].mxu0 %v374
    %v568 = vpop.f32.mrb[0].mxu0
    %v569 = vadd.f32 0.0, %v568
    %v570 = vpop.f32.mrb[0].mxu0
    %v571 = vpop.f32.mrb[0].mxu0
    %v572 = vadd.f32 0.0, %v571
    %v573 = vpop.f32.mrb[0].mxu0
    %574 = vmatprep.mubr.bf16.mxu0 0
    %575 = vmatmul.mubr.bf16.gmra.mrb[0].mxu0 %v375
    %v576 = vpop.f32.mrb[0].mxu0
    %v577 = vadd.f32 0.0, %v576
    %v578 = vpop.f32.mrb[0].mxu0
    %v579 = vpop.f32.mrb[0].mxu0
    %v580 = vadd.f32 0.0, %v579
    %v581 = vpop.f32.mrb[0].mxu0
    %582 = vmatprep.mubr.bf16.mxu0 0
    %583 = vmatmul.mubr.bf16.gmra.mrb[0].mxu0 %v376
    %v584 = vpop.f32.mrb[0].mxu0
    %v585 = vadd.f32 0.0, %v584
    %v586 = vpop.f32.mrb[0].mxu0
    %v587 = vpop.f32.mrb[0].mxu0
    %v588 = vadd.f32 0.0, %v587
    %v589 = vpop.f32.mrb[0].mxu0
    %590 = vmatprep.mubr.bf16.mxu0 0
    %591 = vmatmul.mubr.bf16.gmra.mrb[0].mxu0 %v377
    %v592 = vpop.f32.mrb[0].mxu0
    %v593 = vadd.f32 0.0, %v592
    %v594 = vpop.f32.mrb[0].mxu0
    %v595 = vpop.f32.mrb[0].mxu0
    %v596 = vadd.f32 0.0, %v595
    %v597 = vpop.f32.mrb[0].mxu0
    %598 = vmatprep.mubr.bf16.mxu0 0
    %599 = vmatmul.mubr.bf16.gmra.mrb[0].mxu0 %v378
    %v600 = vpop.f32.mrb[0].mxu0
    %v601 = vadd.f32 0.0, %v600
    %v602 = vpop.f32.mrb[0].mxu0
    %v603 = vpop.f32.mrb[0].mxu0
    %v604 = vadd.f32 0.0, %v603
    %v605 = vpop.f32.mrb[0].mxu0
    %606 = vmatprep.mubr.bf16.mxu0 0
    %607 = vmatmul.mubr.bf16.gmra.mrb[0].mxu0 %v379
    %v608 = vpop.f32.mrb[0].mxu0
    %v609 = vadd.f32 0.0, %v608
    %v610 = vpop.f32.mrb[0].mxu0
    %v611 = vpop.f32.mrb[0].mxu0
    %v612 = vadd.f32 0.0, %v611
    %v613 = vpop.f32.mrb[0].mxu0
    %614 = vmatprep.mubr.bf16.mxu0 0
    %615 = vmatmul.mubr.bf16.gmra.mrb[0].mxu0 %v380
    %v616 = vpop.f32.mrb[0].mxu0
    %v617 = vadd.f32 0.0, %v616
    %v618 = vpop.f32.mrb[0].mxu0
    %v619 = vpop.f32.mrb[0].mxu0
    %v620 = vadd.f32 0.0, %v619
    %v621 = vpop.f32.mrb[0].mxu0
    %622 = vmatprep.mubr.bf16.mxu0 0
    %623 = vmatmul.mubr.bf16.gmra.mrb[0].mxu0 %v381
    %v624 = vpop.f32.mrb[0].mxu0
    %v625 = vadd.f32 0.0, %v624
    %v626 = vpop.f32.mrb[0].mxu0
    %v627 = vpop.f32.mrb[0].mxu0
    %v628 = vadd.f32 0.0, %v627
    %v629 = vpop.f32.mrb[0].mxu0
    %630 = vdwg.mxu0
    %v631 = vadd.f32 %v454, %v569
    %v632 = vadd.f32 %v455, %v572
    %v633 = vadd.f32 %v456, %v577
    %v634 = vadd.f32 %v457, %v580
    %v635 = vadd.f32 %v458, %v585
    %v636 = vadd.f32 %v459, %v588
    %v637 = vadd.f32 %v460, %v593
    %v638 = vadd.f32 %v461, %v596
    %v639 = vadd.f32 %v462, %v601
    %v640 = vadd.f32 %v463, %v604
    %v641 = vadd.f32 %v464, %v609
    %v642 = vadd.f32 %v465, %v612
    %v643 = vadd.f32 %v466, %v617
    %v644 = vadd.f32 %v467, %v620
    %v645 = vadd.f32 %v468, %v625
    %v646 = vadd.f32 %v469, %v628
    %647 = vst [vmem:[%s6] sm:$0xff] %v631
    %648 = vst [vmem:[%s6 + $0x8] sm:$0xff] %v632
    %649 = vst [vmem:[%s6 + $0x10] sm:$0xff] %v633
    %650 = vst [vmem:[%s6 + $0x18] sm:$0xff] %v634
    %651 = vst [vmem:[%s6 + $0x20] sm:$0xff] %v635
    %652 = vst [vmem:[%s6 + $0x28] sm:$0xff] %v636
    %653 = vst [vmem:[%s6 + $0x30] sm:$0xff] %v637
    %654 = vst [vmem:[%s6 + $0x38] sm:$0xff] %v638
    %655 = vst [vmem:[%s6 + $0x40] sm:$0xff] %v639
    %656 = vst [vmem:[%s6 + $0x48] sm:$0xff] %v640
    %657 = vst [vmem:[%s6 + $0x50] sm:$0xff] %v641
    %658 = vst [vmem:[%s6 + $0x58] sm:$0xff] %v642
    %659 = vst [vmem:[%s6 + $0x60] sm:$0xff] %v643
    %660 = vst [vmem:[%s6 + $0x68] sm:$0xff] %v644
    %661 = vst [vmem:[%s6 + $0x70] sm:$0xff] %v645
    %662 = vst [vmem:[%s6 + $0x78] sm:$0xff] %v646
  $region29: #{jknet_forward.7} parent=0 // pred_fallthru
    _
  // Predicated region
  $region30: #{jknet_forward.7} parent=0 // pred_check
    _
  $region31: #{jknet_forward.7} parent=0 // pred_check_branch
    %664 = sbr.rel (0) target = $region33
  $region32: #{jknet_forward.7} parent=0 // pred_region
    _
  $region33: #{jknet_forward.7} parent=0 // pred_fallthru
    _
  // Predicated region
  $region34: #{jknet_forward.7} parent=0 // pred_check
    _
  $region35: #{jknet_forward.7} parent=0 // pred_check_branch
    %666 = sbr.rel (0) target = $region37
  $region36: #{jknet_forward.7} parent=0 // pred_region
    _
  $region37: #{jknet_forward.7} parent=0 // pred_fallthru
    _
  // Predicated region
  $region38: #{jknet_forward.7} parent=0 // pred_check
    _
  $region39: #{jknet_forward.7} parent=0 // pred_check_branch
    %668 = sbr.rel (0) target = $region41
  $region40: #{jknet_forward.7} parent=0 // pred_region
    _
  $region41: #{jknet_forward.7} parent=0 // pred_fallthru
    _
  // Predicated region
  $region42: #{jknet_forward.7} parent=0 // pred_check
    _
  $region43: #{jknet_forward.7} parent=0 // pred_check_branch
    %670 = sbr.rel (0) target = $region45
  $region44: #{jknet_forward.7} parent=0 // pred_region
    _
  $region45: #{jknet_forward.7} parent=0 // pred_fallthru
    _

// kernel: jknet_forward.11
$region0: #{jknet_forward.11}
  #allocation0 [shape = 'u32[]', space=smem, size = 0x4, offset = 0x4, fixed_abs, tag = 'smem constant byte address 0x4 - core index']
  #allocation1 [shape = 'u32[144,128]{1,0:T(1,128)}', space=vmem, size = 0x12000, scoped, tag = 'internal scratch']
  #allocation2 [shape = 'f32[128,128]{1,0:T(8,128)}', space=vmem, size = 0x10000, scoped, tag = 'scratch operand']
  %s0 = inlined_call_operand.vmem [shape: f32[128,128], index: 0, kind: input, shape index: {}, may-alias: {0,6}]
  %s1 = inlined_call_operand.vmem [shape: bf16[128,128], index: 1, kind: input, shape index: {}]
  %s2 = inlined_call_operand.vmem [shape: bf16[128,128], index: 2, kind: input, shape index: {}]
  %s3 = inlined_call_operand.vmem [shape: f32[1,128], index: 3, kind: input, shape index: {}]
  %s4 = inlined_call_operand.vmem [shape: bf16[128,128], index: 4, kind: input, shape index: {}]
  %s5 = inlined_call_operand.hbm [shape: bf16[128,128], index: 5, kind: output, shape index: {0}]
  %s6 = inlined_call_operand.vmem [shape: f32[128,128], index: 6, kind: output, shape index: {1}, may-alias: {0,6}]
  %7 = xla_tuple %s5, %s6
  %s8 = sld [smem:[#allocation0]]
  $region46: #{jknet_forward.11} parent=0
    _
  %s10 = ssub.s32 1, %s8
  %s11 = scalar_select 0, %s10, %s8
  $region1: #{jknet_forward.11} parent=0
    #allocation3 [shape = 'u8[32768]{0}', space=vmem, size = 0x8000, scoped, tag = 'output window, operand 0, single buffered']
    #allocation4 [shape = 's32[1]{0}', space=sflag, size = 0x4, scoped, tag = 'scoped memory for jknet_forward.11']
    %12 = vsyncpa [#allocation4], 0
    // Predicated region
    $region2: #{jknet_forward.11} parent=1 // pred_check
      _
    $region3: #{jknet_forward.11} parent=1 // pred_check_branch
      %14 = sbr.rel (0) target = $region5
    $region4: #{jknet_forward.11} parent=1 // pred_region
      _
    $region5: #{jknet_forward.11} parent=1 // pred_fallthru
      _
    // Predicated region
    $region6: #{jknet_forward.11} parent=1 // pred_check
      _
    $region7: #{jknet_forward.11} parent=1 // pred_check_branch
      %16 = sbr.rel (0) target = $region9
    $region8: #{jknet_forward.11} parent=1 // pred_region
      _
    $region9: #{jknet_forward.11} parent=1 // pred_fallthru
      _
    // Predicated region
    $region10: #{jknet_forward.11} parent=1 // pred_check
      _
    $region11: #{jknet_forward.11} parent=1 // pred_check_branch
      %18 = sbr.rel (0) target = $region13
    $region12: #{jknet_forward.11} parent=1 // pred_region
      _
    $region13: #{jknet_forward.11} parent=1 // pred_fallthru
      _
    // Predicated region
    $region14: #{jknet_forward.11} parent=1 // pred_check
      _
    $region15: #{jknet_forward.11} parent=1 // pred_check_branch
      %20 = sbr.rel (0) target = $region17
    $region16: #{jknet_forward.11} parent=1 // pred_region
      _
    $region17: #{jknet_forward.11} parent=1 // pred_fallthru
      _
    // Predicated region
    $region18: #{jknet_forward.11} parent=1 // pred_check
      _
    $region19: #{jknet_forward.11} parent=1 // pred_check_branch
      %22 = sbr.rel (0) target = $region21
    $region20: #{jknet_forward.11} parent=1 // pred_region
      _
    $region21: #{jknet_forward.11} parent=1 // pred_fallthru
      _
    %p24 = scmp.eq.s32.totalorder 0, 0
    // Predicated region
    $region22: #{jknet_forward.11} parent=1 // pred_check
      %p25 = pneg %p24
    $region23: #{jknet_forward.11} parent=1 // pred_check_branch
      %27 = sbr.rel (%p25) target = $region25
    $region24: #{jknet_forward.11} parent=1 // pred_region
      %28 = vst [vmem:[#allocation2] sm:$0xff] 0.0
      %29 = vst [vmem:[#allocation2 + $0x8] sm:$0xff] 0.0
      %30 = vst [vmem:[#allocation2 + $0x10] sm:$0xff] 0.0
      %31 = vst [vmem:[#allocation2 + $0x18] sm:$0xff] 0.0
      %32 = vst [vmem:[#allocation2 + $0x20] sm:$0xff] 0.0
      %33 = vst [vmem:[#allocation2 + $0x28] sm:$0xff] 0.0
      %34 = vst [vmem:[#allocation2 + $0x30] sm:$0xff] 0.0
      %35 = vst [vmem:[#allocation2 + $0x38] sm:$0xff] 0.0
      %36 = vst [vmem:[#allocation2 + $0x40] sm:$0xff] 0.0
      %37 = vst [vmem:[#allocation2 + $0x48] sm:$0xff] 0.0
      %38 = vst [vmem:[#allocation2 + $0x50] sm:$0xff] 0.0
      %39 = vst [vmem:[#allocation2 + $0x58] sm:$0xff] 0.0
      %40 = vst [vmem:[#allocation2 + $0x60] sm:$0xff] 0.0
      %41 = vst [vmem:[#allocation2 + $0x68] sm:$0xff] 0.0
      %42 = vst [vmem:[#allocation2 + $0x70] sm:$0xff] 0.0
      %43 = vst [vmem:[#allocation2 + $0x78] sm:$0xff] 0.0
    $region25: #{jknet_forward.11} parent=1 // pred_fallthru
      _
    %v44 = vld [vmem:[#allocation2] sm:$0xff]
    %v45 = vld [vmem:[#allocation2 + $0x8] sm:$0xff]
    %v46 = vld [vmem:[#allocation2 + $0x10] sm:$0xff]
    %v47 = vld [vmem:[#allocation2 + $0x18] sm:$0xff]
    %v48 = vld [vmem:[#allocation2 + $0x20] sm:$0xff]
    %v49 = vld [vmem:[#allocation2 + $0x28] sm:$0xff]
    %v50 = vld [vmem:[#allocation2 + $0x30] sm:$0xff]
    %v51 = vld [vmem:[#allocation2 + $0x38] sm:$0xff]
    %v52 = vld [vmem:[#allocation2 + $0x40] sm:$0xff]
    %v53 = vld [vmem:[#allocation2 + $0x48] sm:$0xff]
    %v54 = vld [vmem:[#allocation2 + $0x50] sm:$0xff]
    %v55 = vld [vmem:[#allocation2 + $0x58] sm:$0xff]
    %v56 = vld [vmem:[#allocation2 + $0x60] sm:$0xff]
    %v57 = vld [vmem:[#allocation2 + $0x68] sm:$0xff]
    %v58 = vld [vmem:[#allocation2 + $0x70] sm:$0xff]
    %v59 = vld [vmem:[#allocation2 + $0x78] sm:$0xff]
    %v60 = vld [vmem:[%s1] sm:$0xf]
    %v61 = vld [vmem:[%s1 + $0x4] sm:$0xf]
    %v62 = vld [vmem:[%s1 + $0x8] sm:$0xf]
    %v63 = vld [vmem:[%s1 + $0xc] sm:$0xf]
    %v64 = vld [vmem:[%s1 + $0x10] sm:$0xf]
    %v65 = vld [vmem:[%s1 + $0x14] sm:$0xf]
    %v66 = vld [vmem:[%s1 + $0x18] sm:$0xf]
    %v67 = vld [vmem:[%s1 + $0x1c] sm:$0xf]
    %v68 = vld [vmem:[%s1 + $0x20] sm:$0xf]
    %v69 = vld [vmem:[%s1 + $0x24] sm:$0xf]
    %v70 = vld [vmem:[%s1 + $0x28] sm:$0xf]
    %v71 = vld [vmem:[%s1 + $0x2c] sm:$0xf]
    %v72 = vld [vmem:[%s1 + $0x30] sm:$0xf]
    %v73 = vld [vmem:[%s1 + $0x34] sm:$0xf]
    %v74 = vld [vmem:[%s1 + $0x38] sm:$0xf]
    %v75 = vld [vmem:[%s1 + $0x3c] sm:$0xf]
    %v76 = vld [vmem:[%s2] sm:$0xf]
    %v77 = vld [vmem:[%s2 + $0x4] sm:$0xf]
    %v78 = vld [vmem:[%s2 + $0x8] sm:$0xf]
    %v79 = vld [vmem:[%s2 + $0xc] sm:$0xf]
    %v80 = vld [vmem:[%s2 + $0x10] sm:$0xf]
    %v81 = vld [vmem:[%s2 + $0x14] sm:$0xf]
    %v82 = vld [vmem:[%s2 + $0x18] sm:$0xf]
    %v83 = vld [vmem:[%s2 + $0x1c] sm:$0xf]
    %v84 = vld [vmem:[%s2 + $0x20] sm:$0xf]
    %v85 = vld [vmem:[%s2 + $0x24] sm:$0xf]
    %v86 = vld [vmem:[%s2 + $0x28] sm:$0xf]
    %v87 = vld [vmem:[%s2 + $0x2c] sm:$0xf]
    %v88 = vld [vmem:[%s2 + $0x30] sm:$0xf]
    %v89 = vld [vmem:[%s2 + $0x34] sm:$0xf]
    %v90 = vld [vmem:[%s2 + $0x38] sm:$0xf]
    %v91 = vld [vmem:[%s2 + $0x3c] sm:$0xf]
    %v108 = vunpack.c.l.b16 %v60
    %v109 = vunpack.c.l.b16 %v61
    %v110 = vunpack.c.l.b16 %v62
    %v111 = vunpack.c.l.b16 %v63
    %v112 = vunpack.c.l.b16 %v64
    %v113 = vunpack.c.l.b16 %v65
    %v114 = vunpack.c.l.b16 %v66
    %v115 = vunpack.c.l.b16 %v67
    %v116 = vunpack.c.l.b16 %v68
    %v117 = vunpack.c.l.b16 %v69
    %v118 = vunpack.c.l.b16 %v70
    %v119 = vunpack.c.l.b16 %v71
    %v120 = vunpack.c.l.b16 %v72
    %v121 = vunpack.c.l.b16 %v73
    %v122 = vunpack.c.l.b16 %v74
    %v123 = vunpack.c.l.b16 %v75
    %v124 = vpack.c.b16 %v109, %v108
    %v125 = vpack.c.b16 %v111, %v110
    %v126 = vpack.c.b16 %v113, %v112
    %v127 = vpack.c.b16 %v115, %v114
    %v128 = vpack.c.b16 %v117, %v116
    %v129 = vpack.c.b16 %v119, %v118
    %v130 = vpack.c.b16 %v121, %v120
    %v131 = vpack.c.b16 %v123, %v122
    %v156 = vunpack.c.l.b16 %v76
    %v157 = vunpack.c.l.b16 %v77
    %v158 = vunpack.c.l.b16 %v78
    %v159 = vunpack.c.l.b16 %v79
    %v160 = vunpack.c.l.b16 %v80
    %v161 = vunpack.c.l.b16 %v81
    %v162 = vunpack.c.l.b16 %v82
    %v163 = vunpack.c.l.b16 %v83
    %v164 = vunpack.c.l.b16 %v84
    %v165 = vunpack.c.l.b16 %v85
    %v166 = vunpack.c.l.b16 %v86
    %v167 = vunpack.c.l.b16 %v87
    %v168 = vunpack.c.l.b16 %v88
    %v169 = vunpack.c.l.b16 %v89
    %v170 = vunpack.c.l.b16 %v90
    %v171 = vunpack.c.l.b16 %v91
    %v172 = vpack.c.b16 %v157, %v156
    %v173 = vpack.c.b16 %v159, %v158
    %v174 = vpack.c.b16 %v161, %v160
    %v175 = vpack.c.b16 %v163, %v162
    %v176 = vpack.c.b16 %v165, %v164
    %v177 = vpack.c.b16 %v167, %v166
    %v178 = vpack.c.b16 %v169, %v168
    %v179 = vpack.c.b16 %v171, %v170
    %188 = vmatprep.subr.bf16.mxu0 0
    %189 = vmatpush1.bf16.msra.mxu0 %v172
    %190 = vmatprep.subr.bf16.mxu0 0
    %191 = vmatpush1.bf16.msra.mxu0 %v173
    %192 = vmatprep.subr.bf16.mxu0 0
    %193 = vmatpush1.bf16.msra.mxu0 %v174
    %194 = vmatprep.subr.bf16.mxu0 0
    %195 = vmatpush1.bf16.msra.mxu0 %v175
    %196 = vmatprep.subr.bf16.mxu0 0
    %197 = vmatpush1.bf16.msra.mxu0 %v176
    %198 = vmatprep.subr.bf16.mxu0 0
    %199 = vmatpush1.bf16.msra.mxu0 %v177
    %200 = vmatprep.subr.bf16.mxu0 0
    %201 = vmatpush1.bf16.msra.mxu0 %v178
    %202 = vmatprep.subr.bf16.mxu0 0
    %203 = vmatpush1.bf16.msra.mxu0 %v179
    %204 = vmatprep.subr.bf16.mxu0 0
    %205 = vmatpush1.bf16.msra.mxu0 0
    %206 = vmatprep.subr.bf16.mxu0 0
    %207 = vmatpush1.bf16.msra.mxu0 0
    %208 = vmatprep.subr.bf16.mxu0 0
    %209 = vmatpush1.bf16.msra.mxu0 0
    %210 = vmatprep.subr.bf16.mxu0 0
    %211 = vmatpush1.bf16.msra.mxu0 0
    %212 = vmatprep.subr.bf16.mxu0 0
    %213 = vmatpush1.bf16.msra.mxu0 0
    %214 = vmatprep.subr.bf16.mxu0 0
    %215 = vmatpush1.bf16.msra.mxu0 0
    %216 = vmatprep.subr.bf16.mxu0 0
    %217 = vmatpush1.bf16.msra.mxu0 0
    %218 = vmatprep.subr.bf16.mxu0 0
    %219 = vmatpush1.bf16.msra.mxu0 0
    %220 = vmatprep.mubr.bf16.mxu0 0
    %221 = vmatmul.mubr.bf16.gmra.mrb[0].mxu0 %v124
    %v222 = vpop.f32.mrb[0].mxu0
    %v223 = vadd.f32 0.0, %v222
    %v224 = vpop.f32.mrb[0].mxu0
    %v225 = vpop.f32.mrb[0].mxu0
    %v226 = vadd.f32 0.0, %v225
    %v227 = vpop.f32.mrb[0].mxu0
    %228 = vmatprep.mubr.bf16.mxu0 0
    %229 = vmatmul.mubr.bf16.gmra.mrb[0].mxu0 %v125
    %v230 = vpop.f32.mrb[0].mxu0
    %v231 = vadd.f32 0.0, %v230
    %v232 = vpop.f32.mrb[0].mxu0
    %v233 = vpop.f32.mrb[0].mxu0
    %v234 = vadd.f32 0.0, %v233
    %v235 = vpop.f32.mrb[0].mxu0
    %236 = vmatprep.mubr.bf16.mxu0 0
    %237 = vmatmul.mubr.bf16.gmra.mrb[0].mxu0 %v126
    %v238 = vpop.f32.mrb[0].mxu0
    %v239 = vadd.f32 0.0, %v238
    %v240 = vpop.f32.mrb[0].mxu0
    %v241 = vpop.f32.mrb[0].mxu0
    %v242 = vadd.f32 0.0, %v241
    %v243 = vpop.f32.mrb[0].mxu0
    %244 = vmatprep.mubr.bf16.mxu0 0
    %245 = vmatmul.mubr.bf16.gmra.mrb[0].mxu0 %v127
    %v246 = vpop.f32.mrb[0].mxu0
    %v247 = vadd.f32 0.0, %v246
    %v248 = vpop.f32.mrb[0].mxu0
    %v249 = vpop.f32.mrb[0].mxu0
    %v250 = vadd.f32 0.0, %v249
    %v251 = vpop.f32.mrb[0].mxu0
    %252 = vmatprep.mubr.bf16.mxu0 0
    %253 = vmatmul.mubr.bf16.gmra.mrb[0].mxu0 %v128
    %v254 = vpop.f32.mrb[0].mxu0
    %v255 = vadd.f32 0.0, %v254
    %v256 = vpop.f32.mrb[0].mxu0
    %v257 = vpop.f32.mrb[0].mxu0
    %v258 = vadd.f32 0.0, %v257
    %v259 = vpop.f32.mrb[0].mxu0
    %260 = vmatprep.mubr.bf16.mxu0 0
    %261 = vmatmul.mubr.bf16.gmra.mrb[0].mxu0 %v129
    %v262 = vpop.f32.mrb[0].mxu0
    %v263 = vadd.f32 0.0, %v262
    %v264 = vpop.f32.mrb[0].mxu0
    %v265 = vpop.f32.mrb[0].mxu0
    %v266 = vadd.f32 0.0, %v265
    %v267 = vpop.f32.mrb[0].mxu0
    %268 = vmatprep.mubr.bf16.mxu0 0
    %269 = vmatmul.mubr.bf16.gmra.mrb[0].mxu0 %v130
    %v270 = vpop.f32.mrb[0].mxu0
    %v271 = vadd.f32 0.0, %v270
    %v272 = vpop.f32.mrb[0].mxu0
    %v273 = vpop.f32.mrb[0].mxu0
    %v274 = vadd.f32 0.0, %v273
    %v275 = vpop.f32.mrb[0].mxu0
    %276 = vmatprep.mubr.bf16.mxu0 0
    %277 = vmatmul.mubr.bf16.gmra.mrb[0].mxu0 %v131
    %v278 = vpop.f32.mrb[0].mxu0
    %v279 = vadd.f32 0.0, %v278
    %v280 = vpop.f32.mrb[0].mxu0
    %v281 = vpop.f32.mrb[0].mxu0
    %v282 = vadd.f32 0.0, %v281
    %v283 = vpop.f32.mrb[0].mxu0
    %284 = vdwg.mxu0
    %v285 = vadd.f32 %v44, %v223
    %v286 = vadd.f32 %v45, %v226
    %v287 = vadd.f32 %v46, %v231
    %v288 = vadd.f32 %v47, %v234
    %v289 = vadd.f32 %v48, %v239
    %v290 = vadd.f32 %v49, %v242
    %v291 = vadd.f32 %v50, %v247
    %v292 = vadd.f32 %v51, %v250
    %v293 = vadd.f32 %v52, %v255
    %v294 = vadd.f32 %v53, %v258
    %v295 = vadd.f32 %v54, %v263
    %v296 = vadd.f32 %v55, %v266
    %v297 = vadd.f32 %v56, %v271
    %v298 = vadd.f32 %v57, %v274
    %v299 = vadd.f32 %v58, %v279
    %v300 = vadd.f32 %v59, %v282
    %301 = vst [vmem:[#allocation2] sm:$0xff] %v285
    %302 = vst [vmem:[#allocation2 + $0x8] sm:$0xff] %v286
    %303 = vst [vmem:[#allocation2 + $0x10] sm:$0xff] %v287
    %304 = vst [vmem:[#allocation2 + $0x18] sm:$0xff] %v288
    %305 = vst [vmem:[#allocation2 + $0x20] sm:$0xff] %v289
    %306 = vst [vmem:[#allocation2 + $0x28] sm:$0xff] %v290
    %307 = vst [vmem:[#allocation2 + $0x30] sm:$0xff] %v291
    %308 = vst [vmem:[#allocation2 + $0x38] sm:$0xff] %v292
    %309 = vst [vmem:[#allocation2 + $0x40] sm:$0xff] %v293
    %310 = vst [vmem:[#allocation2 + $0x48] sm:$0xff] %v294
    %311 = vst [vmem:[#allocation2 + $0x50] sm:$0xff] %v295
    %312 = vst [vmem:[#allocation2 + $0x58] sm:$0xff] %v296
    %313 = vst [vmem:[#allocation2 + $0x60] sm:$0xff] %v297
    %314 = vst [vmem:[#allocation2 + $0x68] sm:$0xff] %v298
    %315 = vst [vmem:[#allocation2 + $0x70] sm:$0xff] %v299
    %316 = vst [vmem:[#allocation2 + $0x78] sm:$0xff] %v300
    // Predicated region
    $region26: #{jknet_forward.11} parent=1 // pred_check
      %p317 = pneg %p24
    $region27: #{jknet_forward.11} parent=1 // pred_check_branch
      %319 = sbr.rel (%p317) target = $region29
    $region28: #{jknet_forward.11} parent=1 // pred_region
      %v320 = vld [vmem:[#allocation2] sm:$0xff]
      %v321 = vld [vmem:[#allocation2 + $0x8] sm:$0xff]
      %v322 = vld [vmem:[#allocation2 + $0x10] sm:$0xff]
      %v323 = vld [vmem:[#allocation2 + $0x18] sm:$0xff]
      %v324 = vld [vmem:[#allocation2 + $0x20] sm:$0xff]
      %v325 = vld [vmem:[#allocation2 + $0x28] sm:$0xff]
      %v326 = vld [vmem:[#allocation2 + $0x30] sm:$0xff]
      %v327 = vld [vmem:[#allocation2 + $0x38] sm:$0xff]
      %v328 = vld [vmem:[#allocation2 + $0x40] sm:$0xff]
      %v329 = vld [vmem:[#allocation2 + $0x48] sm:$0xff]
      %v330 = vld [vmem:[#allocation2 + $0x50] sm:$0xff]
      %v331 = vld [vmem:[#allocation2 + $0x58] sm:$0xff]
      %v332 = vld [vmem:[#allocation2 + $0x60] sm:$0xff]
      %v333 = vld [vmem:[#allocation2 + $0x68] sm:$0xff]
      %v334 = vld [vmem:[#allocation2 + $0x70] sm:$0xff]
      %v335 = vld [vmem:[#allocation2 + $0x78] sm:$0xff]
      %v336 = vld [vmem:[%s3] sm:$0x1]
      %v338 = vlaneseq
      %v339 = vshrl.u32 %v338, 7
      %v340 = vsub.s32 0, %v339
      %v341 = vrot.slane %v336, %v340
      %v343 = vadd.f32 %v320, %v341
      %v344 = vadd.f32 %v321, %v341
      %v345 = vadd.f32 %v322, %v341
      %v346 = vadd.f32 %v323, %v341
      %v347 = vadd.f32 %v324, %v341
      %v348 = vadd.f32 %v325, %v341
      %v349 = vadd.f32 %v326, %v341
      %v350 = vadd.f32 %v327, %v341
      %v351 = vadd.f32 %v328, %v341
      %v352 = vadd.f32 %v329, %v341
      %v353 = vadd.f32 %v330, %v341
      %v354 = vadd.f32 %v331, %v341
      %v355 = vadd.f32 %v332, %v341
      %v356 = vadd.f32 %v333, %v341
      %v357 = vadd.f32 %v334, %v341
      %v358 = vadd.f32 %v335, %v341
      %v359 = vmax.f32 %v343, 0.0
      %v360 = vmax.f32 %v344, 0.0
      %v361 = vmax.f32 %v345, 0.0
      %v362 = vmax.f32 %v346, 0.0
      %v363 = vmax.f32 %v347, 0.0
      %v364 = vmax.f32 %v348, 0.0
      %v365 = vmax.f32 %v349, 0.0
      %v366 = vmax.f32 %v350, 0.0
      %v367 = vmax.f32 %v351, 0.0
      %v368 = vmax.f32 %v352, 0.0
      %v369 = vmax.f32 %v353, 0.0
      %v370 = vmax.f32 %v354, 0.0
      %v371 = vmax.f32 %v355, 0.0
      %v372 = vmax.f32 %v356, 0.0
      %v373 = vmax.f32 %v357, 0.0
      %v374 = vmax.f32 %v358, 0.0
      %v375 = vpack.c.bf16 %v360, %v359
      %v376 = vpack.c.bf16 %v362, %v361
      %v377 = vpack.c.bf16 %v364, %v363
      %v378 = vpack.c.bf16 %v366, %v365
      %v379 = vpack.c.bf16 %v368, %v367
      %v380 = vpack.c.bf16 %v370, %v369
      %v381 = vpack.c.bf16 %v372, %v371
      %v382 = vpack.c.bf16 %v374, %v373
      %v391 = vunpack.c.l.b16 %v375
      %v392 = vunpack.c.h.b16 %v375
      %v393 = vunpack.c.l.b16 %v376
      %v394 = vunpack.c.h.b16 %v376
      %v395 = vunpack.c.l.b16 %v377
      %v396 = vunpack.c.h.b16 %v377
      %v397 = vunpack.c.l.b16 %v378
      %v398 = vunpack.c.h.b16 %v378
      %v399 = vunpack.c.l.b16 %v379
      %v400 = vunpack.c.h.b16 %v379
      %v401 = vunpack.c.l.b16 %v380
      %v402 = vunpack.c.h.b16 %v380
      %v403 = vunpack.c.l.b16 %v381
      %v404 = vunpack.c.h.b16 %v381
      %v405 = vunpack.c.l.b16 %v382
      %v406 = vunpack.c.h.b16 %v382
      %v407 = vpack.c.b16 %v391, %v391
      %v408 = vpack.c.b16 %v392, %v392
      %v409 = vpack.c.b16 %v393, %v393
      %v410 = vpack.c.b16 %v394, %v394
      %v411 = vpack.c.b16 %v395, %v395
      %v412 = vpack.c.b16 %v396, %v396
      %v413 = vpack.c.b16 %v397, %v397
      %v414 = vpack.c.b16 %v398, %v398
      %v415 = vpack.c.b16 %v399, %v399
      %v416 = vpack.c.b16 %v400, %v400
      %v417 = vpack.c.b16 %v401, %v401
      %v418 = vpack.c.b16 %v402, %v402
      %v419 = vpack.c.b16 %v403, %v403
      %v420 = vpack.c.b16 %v404, %v404
      %v421 = vpack.c.b16 %v405, %v405
      %v422 = vpack.c.b16 %v406, %v406
      %439 = vst [vmem:[#allocation3] sm:$0xf] %v407
      %440 = vst [vmem:[#allocation3 + $0x4] sm:$0xf] %v408
      %441 = vst [vmem:[#allocation3 + $0x8] sm:$0xf] %v409
      %442 = vst [vmem:[#allocation3 + $0xc] sm:$0xf] %v410
      %443 = vst [vmem:[#allocation3 + $0x10] sm:$0xf] %v411
      %444 = vst [vmem:[#allocation3 + $0x14] sm:$0xf] %v412
      %445 = vst [vmem:[#allocation3 + $0x18] sm:$0xf] %v413
      %446 = vst [vmem:[#allocation3 + $0x1c] sm:$0xf] %v414
      %447 = vst [vmem:[#allocation3 + $0x20] sm:$0xf] %v415
      %448 = vst [vmem:[#allocation3 + $0x24] sm:$0xf] %v416
      %449 = vst [vmem:[#allocation3 + $0x28] sm:$0xf] %v417
      %450 = vst [vmem:[#allocation3 + $0x2c] sm:$0xf] %v418
      %451 = vst [vmem:[#allocation3 + $0x30] sm:$0xf] %v419
      %452 = vst [vmem:[#allocation3 + $0x34] sm:$0xf] %v420
      %453 = vst [vmem:[#allocation3 + $0x38] sm:$0xf] %v421
      %454 = vst [vmem:[#allocation3 + $0x3c] sm:$0xf] %v422
      %v455 = vld [vmem:[%s0] sm:$0xff]
      %v456 = vld [vmem:[%s0 + $0x8] sm:$0xff]
      %v457 = vld [vmem:[%s0 + $0x10] sm:$0xff]
      %v458 = vld [vmem:[%s0 + $0x18] sm:$0xff]
      %v459 = vld [vmem:[%s0 + $0x20] sm:$0xff]
      %v460 = vld [vmem:[%s0 + $0x28] sm:$0xff]
      %v461 = vld [vmem:[%s0 + $0x30] sm:$0xff]
      %v462 = vld [vmem:[%s0 + $0x38] sm:$0xff]
      %v463 = vld [vmem:[%s0 + $0x40] sm:$0xff]
      %v464 = vld [vmem:[%s0 + $0x48] sm:$0xff]
      %v465 = vld [vmem:[%s0 + $0x50] sm:$0xff]
      %v466 = vld [vmem:[%s0 + $0x58] sm:$0xff]
      %v467 = vld [vmem:[%s0 + $0x60] sm:$0xff]
      %v468 = vld [vmem:[%s0 + $0x68] sm:$0xff]
      %v469 = vld [vmem:[%s0 + $0x70] sm:$0xff]
      %v470 = vld [vmem:[%s0 + $0x78] sm:$0xff]
      %v471 = vld [vmem:[%s4] sm:$0xf]
      %v472 = vld [vmem:[%s4 + $0x4] sm:$0xf]
      %v473 = vld [vmem:[%s4 + $0x8] sm:$0xf]
      %v474 = vld [vmem:[%s4 + $0xc] sm:$0xf]
      %v475 = vld [vmem:[%s4 + $0x10] sm:$0xf]
      %v476 = vld [vmem:[%s4 + $0x14] sm:$0xf]
      %v477 = vld [vmem:[%s4 + $0x18] sm:$0xf]
      %v478 = vld [vmem:[%s4 + $0x1c] sm:$0xf]
      %v479 = vld [vmem:[%s4 + $0x20] sm:$0xf]
      %v480 = vld [vmem:[%s4 + $0x24] sm:$0xf]
      %v481 = vld [vmem:[%s4 + $0x28] sm:$0xf]
      %v482 = vld [vmem:[%s4 + $0x2c] sm:$0xf]
      %v483 = vld [vmem:[%s4 + $0x30] sm:$0xf]
      %v484 = vld [vmem:[%s4 + $0x34] sm:$0xf]
      %v485 = vld [vmem:[%s4 + $0x38] sm:$0xf]
      %v486 = vld [vmem:[%s4 + $0x3c] sm:$0xf]
      %v503 = vunpack.c.l.b16 %v471
      %v504 = vunpack.c.l.b16 %v472
      %v505 = vunpack.c.l.b16 %v473
      %v506 = vunpack.c.l.b16 %v474
      %v507 = vunpack.c.l.b16 %v475
      %v508 = vunpack.c.l.b16 %v476
      %v509 = vunpack.c.l.b16 %v477
      %v510 = vunpack.c.l.b16 %v478
      %v511 = vunpack.c.l.b16 %v479
      %v512 = vunpack.c.l.b16 %v480
      %v513 = vunpack.c.l.b16 %v481
      %v514 = vunpack.c.l.b16 %v482
      %v515 = vunpack.c.l.b16 %v483
      %v516 = vunpack.c.l.b16 %v484
      %v517 = vunpack.c.l.b16 %v485
      %v518 = vunpack.c.l.b16 %v486
      %v519 = vpack.c.b16 %v504, %v503
      %v520 = vpack.c.b16 %v506, %v505
      %v521 = vpack.c.b16 %v508, %v507
      %v522 = vpack.c.b16 %v510, %v509
      %v523 = vpack.c.b16 %v512, %v511
      %v524 = vpack.c.b16 %v514, %v513
      %v525 = vpack.c.b16 %v516, %v515
      %v526 = vpack.c.b16 %v518, %v517
      %535 = vmatprep.subr.bf16.mxu0 0
      %536 = vmatpush1.bf16.msra.mxu0 %v519
      %537 = vmatprep.subr.bf16.mxu0 0
      %538 = vmatpush1.bf16.msra.mxu0 %v520
      %539 = vmatprep.subr.bf16.mxu0 0
      %540 = vmatpush1.bf16.msra.mxu0 %v521
      %541 = vmatprep.subr.bf16.mxu0 0
      %542 = vmatpush1.bf16.msra.mxu0 %v522
      %543 = vmatprep.subr.bf16.mxu0 0
      %544 = vmatpush1.bf16.msra.mxu0 %v523
      %545 = vmatprep.subr.bf16.mxu0 0
      %546 = vmatpush1.bf16.msra.mxu0 %v524
      %547 = vmatprep.subr.bf16.mxu0 0
      %548 = vmatpush1.bf16.msra.mxu0 %v525
      %549 = vmatprep.subr.bf16.mxu0 0
      %550 = vmatpush1.bf16.msra.mxu0 %v526
      %551 = vmatprep.subr.bf16.mxu0 0
      %552 = vmatpush1.bf16.msra.mxu0 0
      %553 = vmatprep.subr.bf16.mxu0 0
      %554 = vmatpush1.bf16.msra.mxu0 0
      %555 = vmatprep.subr.bf16.mxu0 0
      %556 = vmatpush1.bf16.msra.mxu0 0
      %557 = vmatprep.subr.bf16.mxu0 0
      %558 = vmatpush1.bf16.msra.mxu0 0
      %559 = vmatprep.subr.bf16.mxu0 0
      %560 = vmatpush1.bf16.msra.mxu0 0
      %561 = vmatprep.subr.bf16.mxu0 0
      %562 = vmatpush1.bf16.msra.mxu0 0
      %563 = vmatprep.subr.bf16.mxu0 0
      %564 = vmatpush1.bf16.msra.mxu0 0
      %565 = vmatprep.subr.bf16.mxu0 0
      %566 = vmatpush1.bf16.msra.mxu0 0
      %567 = vmatprep.mubr.bf16.mxu0 0
      %568 = vmatmul.mubr.bf16.gmra.mrb[0].mxu0 %v375
      %v569 = vpop.f32.mrb[0].mxu0
      %v570 = vadd.f32 0.0, %v569
      %v571 = vpop.f32.mrb[0].mxu0
      %v572 = vpop.f32.mrb[0].mxu0
      %v573 = vadd.f32 0.0, %v572
      %v574 = vpop.f32.mrb[0].mxu0
      %575 = vmatprep.mubr.bf16.mxu0 0
      %576 = vmatmul.mubr.bf16.gmra.mrb[0].mxu0 %v376
      %v577 = vpop.f32.mrb[0].mxu0
      %v578 = vadd.f32 0.0, %v577
      %v579 = vpop.f32.mrb[0].mxu0
      %v580 = vpop.f32.mrb[0].mxu0
      %v581 = vadd.f32 0.0, %v580
      %v582 = vpop.f32.mrb[0].mxu0
      %583 = vmatprep.mubr.bf16.mxu0 0
      %584 = vmatmul.mubr.bf16.gmra.mrb[0].mxu0 %v377
      %v585 = vpop.f32.mrb[0].mxu0
      %v586 = vadd.f32 0.0, %v585
      %v587 = vpop.f32.mrb[0].mxu0
      %v588 = vpop.f32.mrb[0].mxu0
      %v589 = vadd.f32 0.0, %v588
      %v590 = vpop.f32.mrb[0].mxu0
      %591 = vmatprep.mubr.bf16.mxu0 0
      %592 = vmatmul.mubr.bf16.gmra.mrb[0].mxu0 %v378
      %v593 = vpop.f32.mrb[0].mxu0
      %v594 = vadd.f32 0.0, %v593
      %v595 = vpop.f32.mrb[0].mxu0
      %v596 = vpop.f32.mrb[0].mxu0
      %v597 = vadd.f32 0.0, %v596
      %v598 = vpop.f32.mrb[0].mxu0
      %599 = vmatprep.mubr.bf16.mxu0 0
      %600 = vmatmul.mubr.bf16.gmra.mrb[0].mxu0 %v379
      %v601 = vpop.f32.mrb[0].mxu0
      %v602 = vadd.f32 0.0, %v601
      %v603 = vpop.f32.mrb[0].mxu0
      %v604 = vpop.f32.mrb[0].mxu0
      %v605 = vadd.f32 0.0, %v604
      %v606 = vpop.f32.mrb[0].mxu0
      %607 = vmatprep.mubr.bf16.mxu0 0
      %608 = vmatmul.mubr.bf16.gmra.mrb[0].mxu0 %v380
      %v609 = vpop.f32.mrb[0].mxu0
      %v610 = vadd.f32 0.0, %v609
      %v611 = vpop.f32.mrb[0].mxu0
      %v612 = vpop.f32.mrb[0].mxu0
      %v613 = vadd.f32 0.0, %v612
      %v614 = vpop.f32.mrb[0].mxu0
      %615 = vmatprep.mubr.bf16.mxu0 0
      %616 = vmatmul.mubr.bf16.gmra.mrb[0].mxu0 %v381
      %v617 = vpop.f32.mrb[0].mxu0
      %v618 = vadd.f32 0.0, %v617
      %v619 = vpop.f32.mrb[0].mxu0
      %v620 = vpop.f32.mrb[0].mxu0
      %v621 = vadd.f32 0.0, %v620
      %v622 = vpop.f32.mrb[0].mxu0
      %623 = vmatprep.mubr.bf16.mxu0 0
      %624 = vmatmul.mubr.bf16.gmra.mrb[0].mxu0 %v382
      %v625 = vpop.f32.mrb[0].mxu0
      %v626 = vadd.f32 0.0, %v625
      %v627 = vpop.f32.mrb[0].mxu0
      %v628 = vpop.f32.mrb[0].mxu0
      %v629 = vadd.f32 0.0, %v628
      %v630 = vpop.f32.mrb[0].mxu0
      %631 = vdwg.mxu0
      %v632 = vadd.f32 %v455, %v570
      %v633 = vadd.f32 %v456, %v573
      %v634 = vadd.f32 %v457, %v578
      %v635 = vadd.f32 %v458, %v581
      %v636 = vadd.f32 %v459, %v586
      %v637 = vadd.f32 %v460, %v589
      %v638 = vadd.f32 %v461, %v594
      %v639 = vadd.f32 %v462, %v597
      %v640 = vadd.f32 %v463, %v602
      %v641 = vadd.f32 %v464, %v605
      %v642 = vadd.f32 %v465, %v610
      %v643 = vadd.f32 %v466, %v613
      %v644 = vadd.f32 %v467, %v618
      %v645 = vadd.f32 %v468, %v621
      %v646 = vadd.f32 %v469, %v626
      %v647 = vadd.f32 %v470, %v629
      %648 = vst [vmem:[%s6] sm:$0xff] %v632
      %649 = vst [vmem:[%s6 + $0x8] sm:$0xff] %v633
      %650 = vst [vmem:[%s6 + $0x10] sm:$0xff] %v634
      %651 = vst [vmem:[%s6 + $0x18] sm:$0xff] %v635
      %652 = vst [vmem:[%s6 + $0x20] sm:$0xff] %v636
      %653 = vst [vmem:[%s6 + $0x28] sm:$0xff] %v637
      %654 = vst [vmem:[%s6 + $0x30] sm:$0xff] %v638
      %655 = vst [vmem:[%s6 + $0x38] sm:$0xff] %v639
      %656 = vst [vmem:[%s6 + $0x40] sm:$0xff] %v640
      %657 = vst [vmem:[%s6 + $0x48] sm:$0xff] %v641
      %658 = vst [vmem:[%s6 + $0x50] sm:$0xff] %v642
      %659 = vst [vmem:[%s6 + $0x58] sm:$0xff] %v643
      %660 = vst [vmem:[%s6 + $0x60] sm:$0xff] %v644
      %661 = vst [vmem:[%s6 + $0x68] sm:$0xff] %v645
      %662 = vst [vmem:[%s6 + $0x70] sm:$0xff] %v646
      %663 = vst [vmem:[%s6 + $0x78] sm:$0xff] %v647
    $region29: #{jknet_forward.11} parent=1 // pred_fallthru
      _
    // Predicated region
    $region30: #{jknet_forward.11} parent=1 // pred_check
      _
    $region31: #{jknet_forward.11} parent=1 // pred_check_branch
      %665 = sbr.rel (0) target = $region33
    $region32: #{jknet_forward.11} parent=1 // pred_region
      %s667 = ssub.s32 1024, 1024
      %668 = vsyncadd [#allocation4], %s667
      %s669 = sshll.u32 [#allocation3], 4
      %s670 = int_to_ptr.vmem [resolvable:$true] %s669
      %675 = dma.vmem_to_hbm [thread:$0]  %s670, 1024, %s5, [#allocation4], 64, 64, 4
    $region33: #{jknet_forward.11} parent=1 // pred_fallthru
      _
    // Predicated region
    $region34: #{jknet_forward.11} parent=1 // pred_check
      _
    $region35: #{jknet_forward.11} parent=1 // pred_check_branch
      %677 = sbr.rel (0) target = $region37
    $region36: #{jknet_forward.11} parent=1 // pred_region
      _
    $region37: #{jknet_forward.11} parent=1 // pred_fallthru
      _
    // Predicated region
    $region38: #{jknet_forward.11} parent=1 // pred_check
      _
    $region39: #{jknet_forward.11} parent=1 // pred_check_branch
      %679 = sbr.rel (0) target = $region41
    $region40: #{jknet_forward.11} parent=1 // pred_region
      %680 = dma.done [#allocation4], 1024
    $region41: #{jknet_forward.11} parent=1 // pred_fallthru
      _
    // Predicated region
    $region42: #{jknet_forward.11} parent=1 // pred_check
      _
    $region43: #{jknet_forward.11} parent=1 // pred_check_branch
      %682 = sbr.rel (0) target = $region45
    $region44: #{jknet_forward.11} parent=1 // pred_region
      _
    $region45: #{jknet_forward.11} parent=1 // pred_fallthru
      _
    %683 = vsyncpa [#allocation4], 1

</llo_original>
